<compile_context>
chip_gen: v7x
topology: tpu7x:2x2x1
jax: 0.10.0
libtpu: 0.0.40
codegen_flags: <defaults>
</compile_context>

<pallas_src>
import jax
import jax.numpy as jnp
from jax.experimental import pallas as pl
from jax.experimental.pallas import tpu as pltpu

LANE = 128


def _round_up(x, m):
    return (x + m - 1) // m * m


def _pad2d(a, rows, cols):
    return jnp.pad(a, ((0, rows - a.shape[0]), (0, cols - a.shape[1])))


def _trend_basis(exp_dim, target_length):
    """TrendGenerator basis, shape (exp_dim, target_length): basis[i, t] = (t/T)^i."""
    t = jnp.arange(target_length, dtype=jnp.float32) / float(target_length)
    rows = [jnp.ones_like(t) if i == 0 else t ** i for i in range(exp_dim)]
    return jnp.stack(rows, axis=0)


# --------------------------------------------------------------------------------------
# Kernel 1: MLP stack (Linear+ReLU x2) + fused message/update linear projections.
# --------------------------------------------------------------------------------------
def mlp_msg_kernel(x_ref, w0_ref, b0_ref, w1_ref, b1_ref, wmu_ref, bmu_ref,
                   msg_ref, upd_ref):
    f32 = jnp.float32
    h = x_ref[...]
    h = jnp.maximum(jnp.dot(h, w0_ref[...], preferred_element_type=f32) + b0_ref[...], 0.0)
    h = jnp.maximum(jnp.dot(h, w1_ref[...], preferred_element_type=f32) + b1_ref[...], 0.0)
    # One fused matmul for [message | update]; split at the 128-lane boundary.
    mu = jnp.dot(h, wmu_ref[...], preferred_element_type=f32) + bmu_ref[...]
    hpad = msg_ref.shape[-1]
    msg_ref[...] = mu[:, :hpad]
    upd_ref[...] = mu[:, hpad:]


# --------------------------------------------------------------------------------------
# Kernel 2: blocked graph aggregation + theta projections + fused trend-basis heads.
# Grid: (node row tiles [parallel], adjacency column tiles [arbitrary, accumulated]).
# --------------------------------------------------------------------------------------
def agg_trend_kernel(adj_ref, msg_ref, upd_ref, wtbf_ref, basis_ref, out_ref, acc_ref):
    f32 = jnp.float32
    k = pl.program_id(1)

    @pl.when(k == 0)
    def _():
        acc_ref[...] = jnp.zeros_like(acc_ref)

    # agg[i] += sum_j A[i, j] * msg[j]   (normalized neighbor sum, blocked over j)
    acc_ref[...] += jnp.dot(adj_ref[...], msg_ref[...], preferred_element_type=f32)

    @pl.when(k == pl.num_programs(1) - 1)
    def _():
        # InterCorrelation output followed by F.relu (update + aggregated messages).
        h = jnp.maximum(upd_ref[...] + acc_ref[...], 0.0)
        # Fused [theta_b | theta_f] projection (bias=False).
        theta = jnp.dot(h, wtbf_ref[...], preferred_element_type=f32)
        # Block-diagonal fused trend basis: theta @ basis -> [backcast | forecast | 0-pad],
        # one lane-dense store.
        out_ref[...] = jnp.dot(theta, basis_ref[...], preferred_element_type=f32)


# --------------------------------------------------------------------------------------
# Wrapper
# --------------------------------------------------------------------------------------
def trend_block_forward(x, edge_index, edge_weight, params,
                        backcast_length, forecast_length,
                        *, tile_n=128, tile_k=128):
    """x: (num_nodes, backcast_length, 1) or (num_nodes, backcast_length)."""
    # squeeze_dim(x): drop trailing singleton dimension (plain-JAX glue).
    if x.ndim == 3 and x.shape[-1] == 1:
        x = jnp.squeeze(x, axis=-1)
    x = x.astype(jnp.float32)
    n = x.shape[0]
    bc, fc = backcast_length, forecast_length

    h0 = params["w0"].shape[1]
    h1 = params["w1"].shape[1]
    td_b = params["wtb"].shape[1]
    td_f = params["wtf"].shape[1]

    # Padded sizes: features -> 128 lanes, nodes -> tile multiple (lane/sublane dense).
    n_pad = _round_up(max(n, 1), max(tile_n, tile_k))
    bc_pad = _round_up(bc, LANE)
    h0_pad = _round_up(h0, LANE)
    h1_pad = _round_up(h1, LANE)
    td_pad = _round_up(td_b + td_f, LANE)
    out_pad = _round_up(bc + fc, LANE)

    # Densify graph: A[dst, src] = edge_weight, then row-normalize (message_norm=True).
    if edge_weight is None:
        edge_weight = jnp.ones((edge_index.shape[1],), jnp.float32)
    src, dst = edge_index[0], edge_index[1]
    adj = jnp.zeros((n_pad, n_pad), jnp.float32).at[dst, src].add(
        edge_weight.astype(jnp.float32))
    deg = jnp.sum(adj, axis=1, keepdims=True)
    adj = adj / jnp.maximum(deg, 1.0)

    # Zero-pad inputs / weights (padded lanes stay exactly zero through the network).
    x_p = _pad2d(x, n_pad, bc_pad)
    w0 = _pad2d(params["w0"], bc_pad, h0_pad)
    b0 = _pad2d(params["b0"], 1, h0_pad)
    w1 = _pad2d(params["w1"], h0_pad, h1_pad)
    b1 = _pad2d(params["b1"], 1, h1_pad)

    # Fused [message | update] weight / bias.
    wmu = jnp.zeros((h1_pad, 2 * h1_pad), jnp.float32)
    wmu = wmu.at[:h1, :h1].set(params["wm"])
    wmu = wmu.at[:h1, h1_pad:h1_pad + h1].set(params["wu"])
    bmu = jnp.zeros((1, 2 * h1_pad), jnp.float32)
    bmu = bmu.at[:, :h1].set(params["bm"])
    bmu = bmu.at[:, h1_pad:h1_pad + h1].set(params["bu"])

    # Fused [theta_b | theta_f] weight (bias=False).
    wtbf = jnp.zeros((h1_pad, td_pad), jnp.float32)
    wtbf = wtbf.at[:h1, :td_b].set(params["wtb"])
    wtbf = wtbf.at[:h1, td_b:td_b + td_f].set(params["wtf"])

    # Block-diagonal fused trend basis: [theta_b | theta_f] -> [backcast | forecast].
    basis = jnp.zeros((td_pad, out_pad), jnp.float32)
    basis = basis.at[:td_b, :bc].set(_trend_basis(td_b, bc))
    basis = basis.at[td_b:td_b + td_f, bc:bc + fc].set(_trend_basis(td_f, fc))

    const2 = lambda *_: (0, 0)

    # ---- Kernel 1: node-tiled MLP + message/update projections (parallel over nodes) ----
    msg, upd = pl.pallas_call(
        mlp_msg_kernel,
        out_shape=(jax.ShapeDtypeStruct((n_pad, h1_pad), jnp.float32),
                   jax.ShapeDtypeStruct((n_pad, h1_pad), jnp.float32)),
        grid=(n_pad // tile_n,),
        in_specs=[
            pl.BlockSpec((tile_n, bc_pad), lambda i: (i, 0)),
            pl.BlockSpec((bc_pad, h0_pad), const2),
            pl.BlockSpec((1, h0_pad), const2),
            pl.BlockSpec((h0_pad, h1_pad), const2),
            pl.BlockSpec((1, h1_pad), const2),
            pl.BlockSpec((h1_pad, 2 * h1_pad), const2),
            pl.BlockSpec((1, 2 * h1_pad), const2),
        ],
        out_specs=(pl.BlockSpec((tile_n, h1_pad), lambda i: (i, 0)),
                   pl.BlockSpec((tile_n, h1_pad), lambda i: (i, 0))),
        compiler_params=pltpu.CompilerParams(
            dimension_semantics=("parallel",)),
    )(x_p, w0, b0, w1, b1, wmu, bmu)

    # ---- Kernel 2: blocked A @ msg accumulation + theta + trend heads ----
    out = pl.pallas_call(
        agg_trend_kernel,
        out_shape=jax.ShapeDtypeStruct((n_pad, out_pad), jnp.float32),
        grid=(n_pad // tile_n, n_pad // tile_k),
        in_specs=[
            pl.BlockSpec((tile_n, tile_k), lambda i, k: (i, k)),   # adjacency tile
            pl.BlockSpec((tile_k, h1_pad), lambda i, k: (k, 0)),   # message rows (k-tile)
            pl.BlockSpec((tile_n, h1_pad), lambda i, k: (i, 0)),   # update rows (i-tile)
            pl.BlockSpec((h1_pad, td_pad), const2),                # fused theta weight
            pl.BlockSpec((td_pad, out_pad), const2),               # fused trend basis
        ],
        out_specs=pl.BlockSpec((tile_n, out_pad), lambda i, k: (i, 0)),
        scratch_shapes=[pltpu.VMEM((tile_n, h1_pad), jnp.float32)],
        compiler_params=pltpu.CompilerParams(
            dimension_semantics=("parallel", "arbitrary")),
    )(adj, msg, upd, wtbf, basis)

    backcast = out[:n, :bc]
    forecast = out[:n, bc:bc + fc]
    return backcast, forecast


def init_params(key, backcast_length, forecast_length, n_theta_hidden, thetas_dim):
    """Deterministic synthetic parameters. Linear weights stored as (in, out)."""
    del forecast_length  # Trend heads use the fixed polynomial basis (no learned head).
    h0, h1 = n_theta_hidden
    td_b, td_f = thetas_dim
    ks = jax.random.split(key, 10)

    def lin(k, fan_in, fan_out):
        bound = 1.0 / jnp.sqrt(jnp.float32(fan_in))
        return jax.random.uniform(k, (fan_in, fan_out), jnp.float32, -bound, bound)

    def bias(k, fan_in, fan_out):
        bound = 1.0 / jnp.sqrt(jnp.float32(fan_in))
        return jax.random.uniform(k, (1, fan_out), jnp.float32, -bound, bound)

    return {
        # MLP_stack
        "w0": lin(ks[0], backcast_length, h0), "b0": bias(ks[1], backcast_length, h0),
        "w1": lin(ks[2], h0, h1),              "b1": bias(ks[3], h0, h1),
        # InterCorrelation (message / update)
        "wm": lin(ks[4], h1, h1), "bm": bias(ks[5], h1, h1),
        "wu": lin(ks[6], h1, h1), "bu": bias(ks[7], h1, h1),
        # theta projections (bias=False)
        "wtb": lin(ks[8], h1, td_b),
        "wtf": lin(ks[9], h1, td_f),
    }


if __name__ == "__main__":
    # Small shapes consistent with the module.
    num_nodes = 8
    backcast_length = 16
    forecast_length = 8
    n_theta_hidden = [32, 32]
    thetas_dim = [8, 8]

    key = jax.random.PRNGKey(0)
    k_x, k_p = jax.random.split(key)

    # x: (num_nodes, backcast_length, 1) -> squeeze_dim drops the trailing 1.
    x = jax.random.normal(k_x, (num_nodes, backcast_length, 1), jnp.float32)

    # Ring graph: bidirectional edges between consecutive nodes (E = 2 * num_nodes).
    idx = jnp.arange(num_nodes, dtype=jnp.int32)
    nxt = (idx + 1) % num_nodes
    edge_index = jnp.stack(
        [jnp.concatenate([idx, nxt]), jnp.concatenate([nxt, idx])], axis=0)
    edge_weight = jnp.ones((2 * num_nodes,), jnp.float32)

    params = init_params(k_p, backcast_length, forecast_length,
                         n_theta_hidden, thetas_dim)

    fwd = jax.jit(trend_block_forward,
                  static_argnames=("backcast_length", "forecast_length",
                                   "tile_n", "tile_k"))
    backcast, forecast = fwd(x, edge_index, edge_weight, params,
                             backcast_length=backcast_length,
                             forecast_length=forecast_length)
    jax.block_until_ready((backcast, forecast))

    assert backcast.shape == (num_nodes, backcast_length)
    assert forecast.shape == (num_nodes, forecast_length)
    assert bool(jnp.all(jnp.isfinite(backcast)))
    assert bool(jnp.all(jnp.isfinite(forecast)))
    print("KERNEL_OK")
</pallas_src>

<mosaic_0001>
module attributes {stable_mosaic.version = 11 : i64} {
  func.func private @main(%arg0: i32) attributes {dimension_semantics = [#tpu.dimension_semantics<core_parallel>], iteration_bounds = array<i64: 2>, tpu.core_type = #tpu.core_type<sc_scalar_subcore>, window_params = []} {
    return
  }
}

module attributes {stable_mosaic.version = 11 : i64} {
  func.func private @main(%arg0: i32) attributes {dimension_semantics = [#tpu.dimension_semantics<core_parallel>], iteration_bounds = array<i64: 2>, tpu.core_type = #tpu.core_type<sc_scalar_subcore>, window_params = []} {
    return
  }
}

module attributes {stable_mosaic.version = 11 : i64} {
  func.func @mlp_msg_kernel(%arg0: i32, %arg1: memref<128x128xf32, #tpu.memory_space<vmem>>, %arg2: memref<128x128xf32, #tpu.memory_space<vmem>>, %arg3: memref<1x128xf32, #tpu.memory_space<vmem>>, %arg4: memref<128x128xf32, #tpu.memory_space<vmem>>, %arg5: memref<1x128xf32, #tpu.memory_space<vmem>>, %arg6: memref<128x256xf32, #tpu.memory_space<vmem>>, %arg7: memref<1x256xf32, #tpu.memory_space<vmem>>, %arg8: memref<128x128xf32, #tpu.memory_space<vmem>>, %arg9: memref<128x128xf32, #tpu.memory_space<vmem>>) attributes {dimension_semantics = [#tpu.dimension_semantics<parallel>], iteration_bounds = array<i64: 1>, scalar_prefetch = 0 : i64, scratch_operands = 0 : i64, tpu.core_type = #tpu.core_type<tc>, window_params = [{transform_indices = @transform_0, window_bounds = array<i64: 128, 128>}, {pipeline_mode = #tpu.pipeline_mode<synchronous>, transform_indices = @transform_1, window_bounds = array<i64: 128, 128>}, {pipeline_mode = #tpu.pipeline_mode<synchronous>, transform_indices = @transform_2, window_bounds = array<i64: 1, 128>}, {pipeline_mode = #tpu.pipeline_mode<synchronous>, transform_indices = @transform_3, window_bounds = array<i64: 128, 128>}, {pipeline_mode = #tpu.pipeline_mode<synchronous>, transform_indices = @transform_4, window_bounds = array<i64: 1, 128>}, {pipeline_mode = #tpu.pipeline_mode<synchronous>, transform_indices = @transform_5, window_bounds = array<i64: 128, 256>}, {pipeline_mode = #tpu.pipeline_mode<synchronous>, transform_indices = @transform_6, window_bounds = array<i64: 1, 256>}, {transform_indices = @transform_7, window_bounds = array<i64: 128, 128>}, {transform_indices = @transform_8, window_bounds = array<i64: 128, 128>}]} {
    %c0 = arith.constant 0 : index
    %c0_0 = arith.constant 0 : index
    %0 = vector.load %arg1[%c0, %c0_0] : memref<128x128xf32, #tpu.memory_space<vmem>>, vector<128x128xf32>
    %c0_1 = arith.constant 0 : index
    %c0_2 = arith.constant 0 : index
    %1 = vector.load %arg2[%c0_1, %c0_2] : memref<128x128xf32, #tpu.memory_space<vmem>>, vector<128x128xf32>
    %cst = arith.constant dense<0.000000e+00> : vector<128x128xf32>
    %2 = tpu.matmul %0, %1, %cst {dimension_numbers = #tpu.dot_dimension_numbers<[1], [0], [0], [1], [0, 0, 1, 1], [], []>} : vector<128x128xf32>, vector<128x128xf32>, vector<128x128xf32> -> vector<128x128xf32>
    %c0_3 = arith.constant 0 : index
    %c0_4 = arith.constant 0 : index
    %3 = vector.load %arg3[%c0_3, %c0_4] : memref<1x128xf32, #tpu.memory_space<vmem>>, vector<1x128xf32>
    %4 = vector.broadcast %3 : vector<1x128xf32> to vector<128x128xf32>
    %5 = arith.addf %2, %4 : vector<128x128xf32>
    %cst_5 = arith.constant 0.000000e+00 : f32
    %6 = vector.broadcast %cst_5 : f32 to vector<128x128xf32>
    %7 = arith.maximumf %5, %6 : vector<128x128xf32>
    %c0_6 = arith.constant 0 : index
    %c0_7 = arith.constant 0 : index
    %8 = vector.load %arg4[%c0_6, %c0_7] : memref<128x128xf32, #tpu.memory_space<vmem>>, vector<128x128xf32>
    %cst_8 = arith.constant dense<0.000000e+00> : vector<128x128xf32>
    %9 = tpu.matmul %7, %8, %cst_8 {dimension_numbers = #tpu.dot_dimension_numbers<[1], [0], [0], [1], [0, 0, 1, 1], [], []>} : vector<128x128xf32>, vector<128x128xf32>, vector<128x128xf32> -> vector<128x128xf32>
    %c0_9 = arith.constant 0 : index
    %c0_10 = arith.constant 0 : index
    %10 = vector.load %arg5[%c0_9, %c0_10] : memref<1x128xf32, #tpu.memory_space<vmem>>, vector<1x128xf32>
    %11 = vector.broadcast %10 : vector<1x128xf32> to vector<128x128xf32>
    %12 = arith.addf %9, %11 : vector<128x128xf32>
    %cst_11 = arith.constant 0.000000e+00 : f32
    %13 = vector.broadcast %cst_11 : f32 to vector<128x128xf32>
    %14 = arith.maximumf %12, %13 : vector<128x128xf32>
    %c0_12 = arith.constant 0 : index
    %c0_13 = arith.constant 0 : index
    %15 = vector.load %arg6[%c0_12, %c0_13] : memref<128x256xf32, #tpu.memory_space<vmem>>, vector<128x256xf32>
    %cst_14 = arith.constant dense<0.000000e+00> : vector<128x256xf32>
    %16 = tpu.matmul %14, %15, %cst_14 {dimension_numbers = #tpu.dot_dimension_numbers<[1], [0], [0], [1], [0, 0, 1, 1], [], []>} : vector<128x128xf32>, vector<128x256xf32>, vector<128x256xf32> -> vector<128x256xf32>
    %c0_15 = arith.constant 0 : index
    %c0_16 = arith.constant 0 : index
    %17 = vector.load %arg7[%c0_15, %c0_16] : memref<1x256xf32, #tpu.memory_space<vmem>>, vector<1x256xf32>
    %18 = vector.broadcast %17 : vector<1x256xf32> to vector<128x256xf32>
    %19 = arith.addf %16, %18 : vector<128x256xf32>
    %20 = vector.extract_strided_slice %19 {offsets = [0, 0], sizes = [128, 128], strides = [1, 1]} : vector<128x256xf32> to vector<128x128xf32>
    %c0_17 = arith.constant 0 : index
    %c0_18 = arith.constant 0 : index
    %21 = vector.load %arg8[%c0_17, %c0_18] : memref<128x128xf32, #tpu.memory_space<vmem>>, vector<128x128xf32>
    tpu.vector_store %arg8[%c0_17, %c0_18], %20 {strides = array<i32>} : memref<128x128xf32, #tpu.memory_space<vmem>>, vector<128x128xf32>,
    %22 = vector.extract_strided_slice %19 {offsets = [0, 128], sizes = [128, 128], strides = [1, 1]} : vector<128x256xf32> to vector<128x128xf32>
    %c0_19 = arith.constant 0 : index
    %c0_20 = arith.constant 0 : index
    %23 = vector.load %arg9[%c0_19, %c0_20] : memref<128x128xf32, #tpu.memory_space<vmem>>, vector<128x128xf32>
    tpu.vector_store %arg9[%c0_19, %c0_20], %22 {strides = array<i32>} : memref<128x128xf32, #tpu.memory_space<vmem>>, vector<128x128xf32>,
    return
  }
  func.func @transform_0(%arg0: i32) -> (i32, i32) {
    %c0_i32 = arith.constant 0 : i32
    %c0_i32_0 = arith.constant 0 : i32
    return %arg0, %c0_i32 : i32, i32
  }
  func.func @transform_1(%arg0: i32) -> (i32, i32) {
    %c0_i32 = arith.constant 0 : i32
    %c0_i32_0 = arith.constant 0 : i32
    %c0_i32_1 = arith.constant 0 : i32
    return %c0_i32, %c0_i32_0 : i32, i32
  }
  func.func @transform_2(%arg0: i32) -> (i32, i32) {
    %c0_i32 = arith.constant 0 : i32
    %c0_i32_0 = arith.constant 0 : i32
    %c0_i32_1 = arith.constant 0 : i32
    return %c0_i32, %c0_i32_0 : i32, i32
  }
  func.func @transform_3(%arg0: i32) -> (i32, i32) {
    %c0_i32 = arith.constant 0 : i32
    %c0_i32_0 = arith.constant 0 : i32
    %c0_i32_1 = arith.constant 0 : i32
    return %c0_i32, %c0_i32_0 : i32, i32
  }
  func.func @transform_4(%arg0: i32) -> (i32, i32) {
    %c0_i32 = arith.constant 0 : i32
    %c0_i32_0 = arith.constant 0 : i32
    %c0_i32_1 = arith.constant 0 : i32
    return %c0_i32, %c0_i32_0 : i32, i32
  }
  func.func @transform_5(%arg0: i32) -> (i32, i32) {
    %c0_i32 = arith.constant 0 : i32
    %c0_i32_0 = arith.constant 0 : i32
    %c0_i32_1 = arith.constant 0 : i32
    return %c0_i32, %c0_i32_0 : i32, i32
  }
  func.func @transform_6(%arg0: i32) -> (i32, i32) {
    %c0_i32 = arith.constant 0 : i32
    %c0_i32_0 = arith.constant 0 : i32
    %c0_i32_1 = arith.constant 0 : i32
    return %c0_i32, %c0_i32_0 : i32, i32
  }
  func.func @transform_7(%arg0: i32) -> (i32, i32) {
    %c0_i32 = arith.constant 0 : i32
    %c0_i32_0 = arith.constant 0 : i32
    return %arg0, %c0_i32 : i32, i32
  }
  func.func @transform_8(%arg0: i32) -> (i32, i32) {
    %c0_i32 = arith.constant 0 : i32
    %c0_i32_0 = arith.constant 0 : i32
    return %arg0, %c0_i32 : i32, i32
  }
}

module attributes {stable_mosaic.version = 11 : i64} {
  func.func @agg_trend_kernel(%arg0: i32, %arg1: i32, %arg2: memref<128x128xf32, #tpu.memory_space<vmem>>, %arg3: memref<128x128xf32, #tpu.memory_space<vmem>>, %arg4: memref<128x128xf32, #tpu.memory_space<vmem>>, %arg5: memref<128x128xf32, #tpu.memory_space<vmem>>, %arg6: memref<128x128xf32, #tpu.memory_space<vmem>>, %arg7: memref<128x128xf32, #tpu.memory_space<vmem>>, %arg8: memref<128x128xf32, #tpu.memory_space<vmem>>) attributes {dimension_semantics = [#tpu.dimension_semantics<parallel>, #tpu.dimension_semantics<arbitrary>], iteration_bounds = array<i64: 1, 1>, scalar_prefetch = 0 : i64, scratch_operands = 1 : i64, tpu.core_type = #tpu.core_type<tc>, window_params = [{transform_indices = @transform_0, window_bounds = array<i64: 128, 128>}, {transform_indices = @transform_1, window_bounds = array<i64: 128, 128>}, {transform_indices = @transform_2, window_bounds = array<i64: 128, 128>}, {pipeline_mode = #tpu.pipeline_mode<synchronous>, transform_indices = @transform_3, window_bounds = array<i64: 128, 128>}, {pipeline_mode = #tpu.pipeline_mode<synchronous>, transform_indices = @transform_4, window_bounds = array<i64: 128, 128>}, {transform_indices = @transform_5, window_bounds = array<i64: 128, 128>}]} {
    %c0_i32 = arith.constant 0 : i32
    %0 = arith.cmpi eq, %arg1, %c0_i32 : i32
    %1 = arith.extui %0 : i1 to i32
    %c0_i32_0 = arith.constant 0 : i32
    %2 = arith.cmpi ne, %1, %c0_i32_0 : i32
    scf.if %2 {
      %cst_10 = arith.constant 0.000000e+00 : f32
      %12 = vector.broadcast %cst_10 : f32 to vector<128x128xf32>
      %c0_11 = arith.constant 0 : index
      %c0_12 = arith.constant 0 : index
      %13 = vector.load %arg8[%c0_11, %c0_12] : memref<128x128xf32, #tpu.memory_space<vmem>>, vector<128x128xf32>
      tpu.vector_store %arg8[%c0_11, %c0_12], %12 {strides = array<i32>} : memref<128x128xf32, #tpu.memory_space<vmem>>, vector<128x128xf32>,
    } else {
    }
    %c0 = arith.constant 0 : index
    %c0_1 = arith.constant 0 : index
    %3 = vector.load %arg8[%c0, %c0_1] : memref<128x128xf32, #tpu.memory_space<vmem>>, vector<128x128xf32>
    %c0_2 = arith.constant 0 : index
    %c0_3 = arith.constant 0 : index
    %4 = vector.load %arg2[%c0_2, %c0_3] : memref<128x128xf32, #tpu.memory_space<vmem>>, vector<128x128xf32>
    %c0_4 = arith.constant 0 : index
    %c0_5 = arith.constant 0 : index
    %5 = vector.load %arg3[%c0_4, %c0_5] : memref<128x128xf32, #tpu.memory_space<vmem>>, vector<128x128xf32>
    %cst = arith.constant dense<0.000000e+00> : vector<128x128xf32>
    %6 = tpu.matmul %4, %5, %cst {dimension_numbers = #tpu.dot_dimension_numbers<[1], [0], [0], [1], [0, 0, 1, 1], [], []>} : vector<128x128xf32>, vector<128x128xf32>, vector<128x128xf32> -> vector<128x128xf32>
    %7 = arith.addf %3, %6 : vector<128x128xf32>
    %c0_6 = arith.constant 0 : index
    %c0_7 = arith.constant 0 : index
    %8 = vector.load %arg8[%c0_6, %c0_7] : memref<128x128xf32, #tpu.memory_space<vmem>>, vector<128x128xf32>
    tpu.vector_store %arg8[%c0_6, %c0_7], %7 {strides = array<i32>} : memref<128x128xf32, #tpu.memory_space<vmem>>, vector<128x128xf32>,
    %c0_i32_8 = arith.constant 0 : i32
    %9 = arith.cmpi eq, %arg1, %c0_i32_8 : i32
    %10 = arith.extui %9 : i1 to i32
    %c0_i32_9 = arith.constant 0 : i32
    %11 = arith.cmpi ne, %10, %c0_i32_9 : i32
    scf.if %11 {
      %c0_10 = arith.constant 0 : index
      %c0_11 = arith.constant 0 : index
      %12 = vector.load %arg4[%c0_10, %c0_11] : memref<128x128xf32, #tpu.memory_space<vmem>>, vector<128x128xf32>
      %c0_12 = arith.constant 0 : index
      %c0_13 = arith.constant 0 : index
      %13 = vector.load %arg8[%c0_12, %c0_13] : memref<128x128xf32, #tpu.memory_space<vmem>>, vector<128x128xf32>
      %14 = arith.addf %12, %13 : vector<128x128xf32>
      %cst_14 = arith.constant 0.000000e+00 : f32
      %15 = vector.broadcast %cst_14 : f32 to vector<128x128xf32>
      %16 = arith.maximumf %14, %15 : vector<128x128xf32>
      %c0_15 = arith.constant 0 : index
      %c0_16 = arith.constant 0 : index
      %17 = vector.load %arg5[%c0_15, %c0_16] : memref<128x128xf32, #tpu.memory_space<vmem>>, vector<128x128xf32>
      %cst_17 = arith.constant dense<0.000000e+00> : vector<128x128xf32>
      %18 = tpu.matmul %16, %17, %cst_17 {dimension_numbers = #tpu.dot_dimension_numbers<[1], [0], [0], [1], [0, 0, 1, 1], [], []>} : vector<128x128xf32>, vector<128x128xf32>, vector<128x128xf32> -> vector<128x128xf32>
      %c0_18 = arith.constant 0 : index
      %c0_19 = arith.constant 0 : index
      %19 = vector.load %arg6[%c0_18, %c0_19] : memref<128x128xf32, #tpu.memory_space<vmem>>, vector<128x128xf32>
      %cst_20 = arith.constant dense<0.000000e+00> : vector<128x128xf32>
      %20 = tpu.matmul %18, %19, %cst_20 {dimension_numbers = #tpu.dot_dimension_numbers<[1], [0], [0], [1], [0, 0, 1, 1], [], []>} : vector<128x128xf32>, vector<128x128xf32>, vector<128x128xf32> -> vector<128x128xf32>
      %c0_21 = arith.constant 0 : index
      %c0_22 = arith.constant 0 : index
      %21 = vector.load %arg7[%c0_21, %c0_22] : memref<128x128xf32, #tpu.memory_space<vmem>>, vector<128x128xf32>
      tpu.vector_store %arg7[%c0_21, %c0_22], %20 {strides = array<i32>} : memref<128x128xf32, #tpu.memory_space<vmem>>, vector<128x128xf32>,
    } else {
    }
    return
  }
  func.func @transform_0(%arg0: i32, %arg1: i32) -> (i32, i32) {
    %c0_i32 = arith.constant 0 : i32
    return %arg0, %arg1 : i32, i32
  }
  func.func @transform_1(%arg0: i32, %arg1: i32) -> (i32, i32) {
    %c0_i32 = arith.constant 0 : i32
    %c0_i32_0 = arith.constant 0 : i32
    return %arg1, %c0_i32 : i32, i32
  }
  func.func @transform_2(%arg0: i32, %arg1: i32) -> (i32, i32) {
    %c0_i32 = arith.constant 0 : i32
    %c0_i32_0 = arith.constant 0 : i32
    return %arg0, %c0_i32 : i32, i32
  }
  func.func @transform_3(%arg0: i32, %arg1: i32) -> (i32, i32) {
    %c0_i32 = arith.constant 0 : i32
    %c0_i32_0 = arith.constant 0 : i32
    %c0_i32_1 = arith.constant 0 : i32
    return %c0_i32, %c0_i32_0 : i32, i32
  }
  func.func @transform_4(%arg0: i32, %arg1: i32) -> (i32, i32) {
    %c0_i32 = arith.constant 0 : i32
    %c0_i32_0 = arith.constant 0 : i32
    %c0_i32_1 = arith.constant 0 : i32
    return %c0_i32, %c0_i32_0 : i32, i32
  }
  func.func @transform_5(%arg0: i32, %arg1: i32) -> (i32, i32) {
    %c0_i32 = arith.constant 0 : i32
    %c0_i32_0 = arith.constant 0 : i32
    return %arg0, %c0_i32 : i32, i32
  }
}

</mosaic_0001>

<llo_original>
// kernel: trend_block_forward.2
$region0: #{trend_block_forward.2}
  #allocation0 [shape = 'u32[]', space=smem, size = 0x4, offset = 0x4, fixed_abs, tag = 'smem constant byte address 0x4 - core index']
  #allocation1 [shape = 'u32[144,128]{1,0:T(1,128)}', space=vmem, size = 0x12000, scoped, tag = 'internal scratch']
  %s0 = inlined_call_operand.vmem [shape: f32[128,128], index: 0, kind: input, shape index: {}]
  %s1 = inlined_call_operand.vmem [shape: f32[128,128], index: 1, kind: input, shape index: {}]
  %s2 = inlined_call_operand.vmem [shape: f32[1,128], index: 2, kind: input, shape index: {}]
  %s3 = inlined_call_operand.vmem [shape: f32[128,128], index: 3, kind: input, shape index: {}]
  %s4 = inlined_call_operand.vmem [shape: f32[1,128], index: 4, kind: input, shape index: {}]
  %s5 = inlined_call_operand.vmem [shape: f32[128,256], index: 5, kind: input, shape index: {}]
  %s6 = inlined_call_operand.vmem [shape: f32[1,256], index: 6, kind: input, shape index: {}]
  %s7 = inlined_call_operand.vmem [shape: f32[128,128], index: 7, kind: output, shape index: {0}]
  %s8 = inlined_call_operand.vmem [shape: f32[128,128], index: 8, kind: output, shape index: {1}]
  %9 = xla_tuple %s7, %s8
  %s10 = sld [smem:[#allocation0]]
  $region46: #{trend_block_forward.2} parent=0
    _
  %s12 = ssub.s32 1, %s10
  %s13 = scalar_select 0, %s12, %s10
  // Predicated region
  $region2: #{trend_block_forward.2} parent=0 // pred_check
    _
  $region3: #{trend_block_forward.2} parent=0 // pred_check_branch
    %15 = sbr.rel (0) target = $region5
  $region4: #{trend_block_forward.2} parent=0 // pred_region
    _
  $region5: #{trend_block_forward.2} parent=0 // pred_fallthru
    _
  // Predicated region
  $region6: #{trend_block_forward.2} parent=0 // pred_check
    _
  $region7: #{trend_block_forward.2} parent=0 // pred_check_branch
    %17 = sbr.rel (0) target = $region9
  $region8: #{trend_block_forward.2} parent=0 // pred_region
    _
  $region9: #{trend_block_forward.2} parent=0 // pred_fallthru
    _
  // Predicated region
  $region10: #{trend_block_forward.2} parent=0 // pred_check
    _
  $region11: #{trend_block_forward.2} parent=0 // pred_check_branch
    %19 = sbr.rel (0) target = $region13
  $region12: #{trend_block_forward.2} parent=0 // pred_region
    _
  $region13: #{trend_block_forward.2} parent=0 // pred_fallthru
    _
  // Predicated region
  $region14: #{trend_block_forward.2} parent=0 // pred_check
    _
  $region15: #{trend_block_forward.2} parent=0 // pred_check_branch
    %21 = sbr.rel (0) target = $region17
  $region16: #{trend_block_forward.2} parent=0 // pred_region
    _
  $region17: #{trend_block_forward.2} parent=0 // pred_fallthru
    _
  // Predicated region
  $region18: #{trend_block_forward.2} parent=0 // pred_check
    _
  $region19: #{trend_block_forward.2} parent=0 // pred_check_branch
    %23 = sbr.rel (0) target = $region21
  $region20: #{trend_block_forward.2} parent=0 // pred_region
    _
  $region21: #{trend_block_forward.2} parent=0 // pred_fallthru
    _
  // Predicated region
  $region22: #{trend_block_forward.2} parent=0 // pred_check
    _
  $region23: #{trend_block_forward.2} parent=0 // pred_check_branch
    %25 = sbr.rel (0) target = $region25
  $region24: #{trend_block_forward.2} parent=0 // pred_region
    _
  $region25: #{trend_block_forward.2} parent=0 // pred_fallthru
    _
  // Predicated region
  $region26: #{trend_block_forward.2} parent=0 // pred_check
    _
  $region27: #{trend_block_forward.2} parent=0 // pred_check_branch
    %27 = sbr.rel (0) target = $region29
  $region28: #{trend_block_forward.2} parent=0 // pred_region
    _
  $region29: #{trend_block_forward.2} parent=0 // pred_fallthru
    _
  %v28 = vld [vmem:[%s0] sm:$0xff]
  %v29 = vld [vmem:[%s0 + $0x8] sm:$0xff]
  %v30 = vld [vmem:[%s0 + $0x10] sm:$0xff]
  %v31 = vld [vmem:[%s0 + $0x18] sm:$0xff]
  %v32 = vld [vmem:[%s0 + $0x20] sm:$0xff]
  %v33 = vld [vmem:[%s0 + $0x28] sm:$0xff]
  %v34 = vld [vmem:[%s0 + $0x30] sm:$0xff]
  %v35 = vld [vmem:[%s0 + $0x38] sm:$0xff]
  %v36 = vld [vmem:[%s0 + $0x40] sm:$0xff]
  %v37 = vld [vmem:[%s0 + $0x48] sm:$0xff]
  %v38 = vld [vmem:[%s0 + $0x50] sm:$0xff]
  %v39 = vld [vmem:[%s0 + $0x58] sm:$0xff]
  %v40 = vld [vmem:[%s0 + $0x60] sm:$0xff]
  %v41 = vld [vmem:[%s0 + $0x68] sm:$0xff]
  %v42 = vld [vmem:[%s0 + $0x70] sm:$0xff]
  %v43 = vld [vmem:[%s0 + $0x78] sm:$0xff]
  %v44 = vld [vmem:[%s1] sm:$0xff]
  %v45 = vld [vmem:[%s1 + $0x8] sm:$0xff]
  %v46 = vld [vmem:[%s1 + $0x10] sm:$0xff]
  %v47 = vld [vmem:[%s1 + $0x18] sm:$0xff]
  %v48 = vld [vmem:[%s1 + $0x20] sm:$0xff]
  %v49 = vld [vmem:[%s1 + $0x28] sm:$0xff]
  %v50 = vld [vmem:[%s1 + $0x30] sm:$0xff]
  %v51 = vld [vmem:[%s1 + $0x38] sm:$0xff]
  %v52 = vld [vmem:[%s1 + $0x40] sm:$0xff]
  %v53 = vld [vmem:[%s1 + $0x48] sm:$0xff]
  %v54 = vld [vmem:[%s1 + $0x50] sm:$0xff]
  %v55 = vld [vmem:[%s1 + $0x58] sm:$0xff]
  %v56 = vld [vmem:[%s1 + $0x60] sm:$0xff]
  %v57 = vld [vmem:[%s1 + $0x68] sm:$0xff]
  %v58 = vld [vmem:[%s1 + $0x70] sm:$0xff]
  %v59 = vld [vmem:[%s1 + $0x78] sm:$0xff]
  %v60 = vld [vmem:[%s2] sm:$0x1]
  %v62 = vlaneseq
  %v63 = vshrl.u32 %v62, 7
  %v64 = vsub.s32 0, %v63
  %v65 = vrot.slane %v60, %v64
  %67 = vmatprep.subr.mxu0 0.0
  %68 = vmatpush1.msra.mxu0 %v44
  %69 = vmatprep.subr.mxu0 0.0
  %70 = vmatpush1.msra.mxu0 %v45
  %71 = vmatprep.subr.mxu0 0.0
  %72 = vmatpush1.msra.mxu0 %v46
  %73 = vmatprep.subr.mxu0 0.0
  %74 = vmatpush1.msra.mxu0 %v47
  %75 = vmatprep.subr.mxu0 0.0
  %76 = vmatpush1.msra.mxu0 %v48
  %77 = vmatprep.subr.mxu0 0.0
  %78 = vmatpush1.msra.mxu0 %v49
  %79 = vmatprep.subr.mxu0 0.0
  %80 = vmatpush1.msra.mxu0 %v50
  %81 = vmatprep.subr.mxu0 0.0
  %82 = vmatpush1.msra.mxu0 %v51
  %83 = vmatprep.subr.mxu0 0.0
  %84 = vmatpush1.msra.mxu0 %v52
  %85 = vmatprep.subr.mxu0 0.0
  %86 = vmatpush1.msra.mxu0 %v53
  %87 = vmatprep.subr.mxu0 0.0
  %88 = vmatpush1.msra.mxu0 %v54
  %89 = vmatprep.subr.mxu0 0.0
  %90 = vmatpush1.msra.mxu0 %v55
  %91 = vmatprep.subr.mxu0 0.0
  %92 = vmatpush1.msra.mxu0 %v56
  %93 = vmatprep.subr.mxu0 0.0
  %94 = vmatpush1.msra.mxu0 %v57
  %95 = vmatprep.subr.mxu0 0.0
  %96 = vmatpush1.msra.mxu0 %v58
  %97 = vmatprep.subr.mxu0 0.0
  %98 = vmatpush1.msra.mxu0 %v59
  %99 = vmatprep.subr.mxu0 0.0
  %100 = vmatpush1.msra.mxu0 0.0
  %101 = vmatprep.subr.mxu0 0.0
  %102 = vmatpush1.msra.mxu0 0.0
  %103 = vmatprep.subr.mxu0 0.0
  %104 = vmatpush1.msra.mxu0 0.0
  %105 = vmatprep.subr.mxu0 0.0
  %106 = vmatpush1.msra.mxu0 0.0
  %107 = vmatprep.subr.mxu0 0.0
  %108 = vmatpush1.msra.mxu0 0.0
  %109 = vmatprep.subr.mxu0 0.0
  %110 = vmatpush1.msra.mxu0 0.0
  %111 = vmatprep.subr.mxu0 0.0
  %112 = vmatpush1.msra.mxu0 0.0
  %113 = vmatprep.subr.mxu0 0.0
  %114 = vmatpush1.msra.mxu0 0.0
  %115 = vmatprep.subr.mxu0 0.0
  %116 = vmatpush1.msra.mxu0 0.0
  %117 = vmatprep.subr.mxu0 0.0
  %118 = vmatpush1.msra.mxu0 0.0
  %119 = vmatprep.subr.mxu0 0.0
  %120 = vmatpush1.msra.mxu0 0.0
  %121 = vmatprep.subr.mxu0 0.0
  %122 = vmatpush1.msra.mxu0 0.0
  %123 = vmatprep.subr.mxu0 0.0
  %124 = vmatpush1.msra.mxu0 0.0
  %125 = vmatprep.subr.mxu0 0.0
  %126 = vmatpush1.msra.mxu0 0.0
  %127 = vmatprep.subr.mxu0 0.0
  %128 = vmatpush1.msra.mxu0 0.0
  %129 = vmatprep.subr.mxu0 0.0
  %130 = vmatpush1.msra.mxu0 0.0
  %131 = vmatprep.mubr.f32.mxu0 0.0
  %132 = vmatmul.mubr.f32.gmra.mrb[0].mxu0 %v28
  %v133 = vpop.f32.mrb[0].mxu0
  %v134 = vadd.f32 %v65, %v133
  %v135 = vpop.f32.mrb[0].mxu0
  %136 = vmatprep.mubr.f32.mxu0 0.0
  %137 = vmatmul.mubr.f32.gmra.mrb[0].mxu0 %v29
  %v138 = vpop.f32.mrb[0].mxu0
  %v139 = vadd.f32 %v65, %v138
  %v140 = vpop.f32.mrb[0].mxu0
  %141 = vmatprep.mubr.f32.mxu0 0.0
  %142 = vmatmul.mubr.f32.gmra.mrb[0].mxu0 %v30
  %v143 = vpop.f32.mrb[0].mxu0
  %v144 = vadd.f32 %v65, %v143
  %v145 = vpop.f32.mrb[0].mxu0
  %146 = vmatprep.mubr.f32.mxu0 0.0
  %147 = vmatmul.mubr.f32.gmra.mrb[0].mxu0 %v31
  %v148 = vpop.f32.mrb[0].mxu0
  %v149 = vadd.f32 %v65, %v148
  %v150 = vpop.f32.mrb[0].mxu0
  %151 = vmatprep.mubr.f32.mxu0 0.0
  %152 = vmatmul.mubr.f32.gmra.mrb[0].mxu0 %v32
  %v153 = vpop.f32.mrb[0].mxu0
  %v154 = vadd.f32 %v65, %v153
  %v155 = vpop.f32.mrb[0].mxu0
  %156 = vmatprep.mubr.f32.mxu0 0.0
  %157 = vmatmul.mubr.f32.gmra.mrb[0].mxu0 %v33
  %v158 = vpop.f32.mrb[0].mxu0
  %v159 = vadd.f32 %v65, %v158
  %v160 = vpop.f32.mrb[0].mxu0
  %161 = vmatprep.mubr.f32.mxu0 0.0
  %162 = vmatmul.mubr.f32.gmra.mrb[0].mxu0 %v34
  %v163 = vpop.f32.mrb[0].mxu0
  %v164 = vadd.f32 %v65, %v163
  %v165 = vpop.f32.mrb[0].mxu0
  %166 = vmatprep.mubr.f32.mxu0 0.0
  %167 = vmatmul.mubr.f32.gmra.mrb[0].mxu0 %v35
  %v168 = vpop.f32.mrb[0].mxu0
  %v169 = vadd.f32 %v65, %v168
  %v170 = vpop.f32.mrb[0].mxu0
  %171 = vmatprep.mubr.f32.mxu0 0.0
  %172 = vmatmul.mubr.f32.gmra.mrb[0].mxu0 %v36
  %v173 = vpop.f32.mrb[0].mxu0
  %v174 = vadd.f32 %v65, %v173
  %v175 = vpop.f32.mrb[0].mxu0
  %176 = vmatprep.mubr.f32.mxu0 0.0
  %177 = vmatmul.mubr.f32.gmra.mrb[0].mxu0 %v37
  %v178 = vpop.f32.mrb[0].mxu0
  %v179 = vadd.f32 %v65, %v178
  %v180 = vpop.f32.mrb[0].mxu0
  %181 = vmatprep.mubr.f32.mxu0 0.0
  %182 = vmatmul.mubr.f32.gmra.mrb[0].mxu0 %v38
  %v183 = vpop.f32.mrb[0].mxu0
  %v184 = vadd.f32 %v65, %v183
  %v185 = vpop.f32.mrb[0].mxu0
  %186 = vmatprep.mubr.f32.mxu0 0.0
  %187 = vmatmul.mubr.f32.gmra.mrb[0].mxu0 %v39
  %v188 = vpop.f32.mrb[0].mxu0
  %v189 = vadd.f32 %v65, %v188
  %v190 = vpop.f32.mrb[0].mxu0
  %191 = vmatprep.mubr.f32.mxu0 0.0
  %192 = vmatmul.mubr.f32.gmra.mrb[0].mxu0 %v40
  %v193 = vpop.f32.mrb[0].mxu0
  %v194 = vadd.f32 %v65, %v193
  %v195 = vpop.f32.mrb[0].mxu0
  %196 = vmatprep.mubr.f32.mxu0 0.0
  %197 = vmatmul.mubr.f32.gmra.mrb[0].mxu0 %v41
  %v198 = vpop.f32.mrb[0].mxu0
  %v199 = vadd.f32 %v65, %v198
  %v200 = vpop.f32.mrb[0].mxu0
  %201 = vmatprep.mubr.f32.mxu0 0.0
  %202 = vmatmul.mubr.f32.gmra.mrb[0].mxu0 %v42
  %v203 = vpop.f32.mrb[0].mxu0
  %v204 = vadd.f32 %v65, %v203
  %v205 = vpop.f32.mrb[0].mxu0
  %206 = vmatprep.mubr.f32.mxu0 0.0
  %207 = vmatmul.mubr.f32.gmra.mrb[0].mxu0 %v43
  %v208 = vpop.f32.mrb[0].mxu0
  %v209 = vadd.f32 %v65, %v208
  %v210 = vpop.f32.mrb[0].mxu0
  %211 = vdwg.mxu0
  %v212 = vmax.f32 %v134, 0.0
  %v213 = vmax.f32 %v139, 0.0
  %v214 = vmax.f32 %v144, 0.0
  %v215 = vmax.f32 %v149, 0.0
  %v216 = vmax.f32 %v154, 0.0
  %v217 = vmax.f32 %v159, 0.0
  %v218 = vmax.f32 %v164, 0.0
  %v219 = vmax.f32 %v169, 0.0
  %v220 = vmax.f32 %v174, 0.0
  %v221 = vmax.f32 %v179, 0.0
  %v222 = vmax.f32 %v184, 0.0
  %v223 = vmax.f32 %v189, 0.0
  %v224 = vmax.f32 %v194, 0.0
  %v225 = vmax.f32 %v199, 0.0
  %v226 = vmax.f32 %v204, 0.0
  %v227 = vmax.f32 %v209, 0.0
  %v228 = vld [vmem:[%s3] sm:$0xff]
  %v229 = vld [vmem:[%s3 + $0x8] sm:$0xff]
  %v230 = vld [vmem:[%s3 + $0x10] sm:$0xff]
  %v231 = vld [vmem:[%s3 + $0x18] sm:$0xff]
  %v232 = vld [vmem:[%s3 + $0x20] sm:$0xff]
  %v233 = vld [vmem:[%s3 + $0x28] sm:$0xff]
  %v234 = vld [vmem:[%s3 + $0x30] sm:$0xff]
  %v235 = vld [vmem:[%s3 + $0x38] sm:$0xff]
  %v236 = vld [vmem:[%s3 + $0x40] sm:$0xff]
  %v237 = vld [vmem:[%s3 + $0x48] sm:$0xff]
  %v238 = vld [vmem:[%s3 + $0x50] sm:$0xff]
  %v239 = vld [vmem:[%s3 + $0x58] sm:$0xff]
  %v240 = vld [vmem:[%s3 + $0x60] sm:$0xff]
  %v241 = vld [vmem:[%s3 + $0x68] sm:$0xff]
  %v242 = vld [vmem:[%s3 + $0x70] sm:$0xff]
  %v243 = vld [vmem:[%s3 + $0x78] sm:$0xff]
  %v244 = vld [vmem:[%s4] sm:$0x1]
  %v246 = vlaneseq
  %v247 = vshrl.u32 %v246, 7
  %v248 = vsub.s32 0, %v247
  %v249 = vrot.slane %v244, %v248
  %251 = vmatprep.subr.mxu0 0.0
  %252 = vmatpush1.msra.mxu0 %v228
  %253 = vmatprep.subr.mxu0 0.0
  %254 = vmatpush1.msra.mxu0 %v229
  %255 = vmatprep.subr.mxu0 0.0
  %256 = vmatpush1.msra.mxu0 %v230
  %257 = vmatprep.subr.mxu0 0.0
  %258 = vmatpush1.msra.mxu0 %v231
  %259 = vmatprep.subr.mxu0 0.0
  %260 = vmatpush1.msra.mxu0 %v232
  %261 = vmatprep.subr.mxu0 0.0
  %262 = vmatpush1.msra.mxu0 %v233
  %263 = vmatprep.subr.mxu0 0.0
  %264 = vmatpush1.msra.mxu0 %v234
  %265 = vmatprep.subr.mxu0 0.0
  %266 = vmatpush1.msra.mxu0 %v235
  %267 = vmatprep.subr.mxu0 0.0
  %268 = vmatpush1.msra.mxu0 %v236
  %269 = vmatprep.subr.mxu0 0.0
  %270 = vmatpush1.msra.mxu0 %v237
  %271 = vmatprep.subr.mxu0 0.0
  %272 = vmatpush1.msra.mxu0 %v238
  %273 = vmatprep.subr.mxu0 0.0
  %274 = vmatpush1.msra.mxu0 %v239
  %275 = vmatprep.subr.mxu0 0.0
  %276 = vmatpush1.msra.mxu0 %v240
  %277 = vmatprep.subr.mxu0 0.0
  %278 = vmatpush1.msra.mxu0 %v241
  %279 = vmatprep.subr.mxu0 0.0
  %280 = vmatpush1.msra.mxu0 %v242
  %281 = vmatprep.subr.mxu0 0.0
  %282 = vmatpush1.msra.mxu0 %v243
  %283 = vmatprep.subr.mxu0 0.0
  %284 = vmatpush1.msra.mxu0 0.0
  %285 = vmatprep.subr.mxu0 0.0
  %286 = vmatpush1.msra.mxu0 0.0
  %287 = vmatprep.subr.mxu0 0.0
  %288 = vmatpush1.msra.mxu0 0.0
  %289 = vmatprep.subr.mxu0 0.0
  %290 = vmatpush1.msra.mxu0 0.0
  %291 = vmatprep.subr.mxu0 0.0
  %292 = vmatpush1.msra.mxu0 0.0
  %293 = vmatprep.subr.mxu0 0.0
  %294 = vmatpush1.msra.mxu0 0.0
  %295 = vmatprep.subr.mxu0 0.0
  %296 = vmatpush1.msra.mxu0 0.0
  %297 = vmatprep.subr.mxu0 0.0
  %298 = vmatpush1.msra.mxu0 0.0
  %299 = vmatprep.subr.mxu0 0.0
  %300 = vmatpush1.msra.mxu0 0.0
  %301 = vmatprep.subr.mxu0 0.0
  %302 = vmatpush1.msra.mxu0 0.0
  %303 = vmatprep.subr.mxu0 0.0
  %304 = vmatpush1.msra.mxu0 0.0
  %305 = vmatprep.subr.mxu0 0.0
  %306 = vmatpush1.msra.mxu0 0.0
  %307 = vmatprep.subr.mxu0 0.0
  %308 = vmatpush1.msra.mxu0 0.0
  %309 = vmatprep.subr.mxu0 0.0
  %310 = vmatpush1.msra.mxu0 0.0
  %311 = vmatprep.subr.mxu0 0.0
  %312 = vmatpush1.msra.mxu0 0.0
  %313 = vmatprep.subr.mxu0 0.0
  %314 = vmatpush1.msra.mxu0 0.0
  %315 = vmatprep.mubr.f32.mxu0 0.0
  %316 = vmatmul.mubr.f32.gmra.mrb[0].mxu0 %v212
  %v317 = vpop.f32.mrb[0].mxu0
  %v318 = vadd.f32 %v249, %v317
  %v319 = vpop.f32.mrb[0].mxu0
  %320 = vmatprep.mubr.f32.mxu0 0.0
  %321 = vmatmul.mubr.f32.gmra.mrb[0].mxu0 %v213
  %v322 = vpop.f32.mrb[0].mxu0
  %v323 = vadd.f32 %v249, %v322
  %v324 = vpop.f32.mrb[0].mxu0
  %325 = vmatprep.mubr.f32.mxu0 0.0
  %326 = vmatmul.mubr.f32.gmra.mrb[0].mxu0 %v214
  %v327 = vpop.f32.mrb[0].mxu0
  %v328 = vadd.f32 %v249, %v327
  %v329 = vpop.f32.mrb[0].mxu0
  %330 = vmatprep.mubr.f32.mxu0 0.0
  %331 = vmatmul.mubr.f32.gmra.mrb[0].mxu0 %v215
  %v332 = vpop.f32.mrb[0].mxu0
  %v333 = vadd.f32 %v249, %v332
  %v334 = vpop.f32.mrb[0].mxu0
  %335 = vmatprep.mubr.f32.mxu0 0.0
  %336 = vmatmul.mubr.f32.gmra.mrb[0].mxu0 %v216
  %v337 = vpop.f32.mrb[0].mxu0
  %v338 = vadd.f32 %v249, %v337
  %v339 = vpop.f32.mrb[0].mxu0
  %340 = vmatprep.mubr.f32.mxu0 0.0
  %341 = vmatmul.mubr.f32.gmra.mrb[0].mxu0 %v217
  %v342 = vpop.f32.mrb[0].mxu0
  %v343 = vadd.f32 %v249, %v342
  %v344 = vpop.f32.mrb[0].mxu0
  %345 = vmatprep.mubr.f32.mxu0 0.0
  %346 = vmatmul.mubr.f32.gmra.mrb[0].mxu0 %v218
  %v347 = vpop.f32.mrb[0].mxu0
  %v348 = vadd.f32 %v249, %v347
  %v349 = vpop.f32.mrb[0].mxu0
  %350 = vmatprep.mubr.f32.mxu0 0.0
  %351 = vmatmul.mubr.f32.gmra.mrb[0].mxu0 %v219
  %v352 = vpop.f32.mrb[0].mxu0
  %v353 = vadd.f32 %v249, %v352
  %v354 = vpop.f32.mrb[0].mxu0
  %355 = vmatprep.mubr.f32.mxu0 0.0
  %356 = vmatmul.mubr.f32.gmra.mrb[0].mxu0 %v220
  %v357 = vpop.f32.mrb[0].mxu0
  %v358 = vadd.f32 %v249, %v357
  %v359 = vpop.f32.mrb[0].mxu0
  %360 = vmatprep.mubr.f32.mxu0 0.0
  %361 = vmatmul.mubr.f32.gmra.mrb[0].mxu0 %v221
  %v362 = vpop.f32.mrb[0].mxu0
  %v363 = vadd.f32 %v249, %v362
  %v364 = vpop.f32.mrb[0].mxu0
  %365 = vmatprep.mubr.f32.mxu0 0.0
  %366 = vmatmul.mubr.f32.gmra.mrb[0].mxu0 %v222
  %v367 = vpop.f32.mrb[0].mxu0
  %v368 = vadd.f32 %v249, %v367
  %v369 = vpop.f32.mrb[0].mxu0
  %370 = vmatprep.mubr.f32.mxu0 0.0
  %371 = vmatmul.mubr.f32.gmra.mrb[0].mxu0 %v223
  %v372 = vpop.f32.mrb[0].mxu0
  %v373 = vadd.f32 %v249, %v372
  %v374 = vpop.f32.mrb[0].mxu0
  %375 = vmatprep.mubr.f32.mxu0 0.0
  %376 = vmatmul.mubr.f32.gmra.mrb[0].mxu0 %v224
  %v377 = vpop.f32.mrb[0].mxu0
  %v378 = vadd.f32 %v249, %v377
  %v379 = vpop.f32.mrb[0].mxu0
  %380 = vmatprep.mubr.f32.mxu0 0.0
  %381 = vmatmul.mubr.f32.gmra.mrb[0].mxu0 %v225
  %v382 = vpop.f32.mrb[0].mxu0
  %v383 = vadd.f32 %v249, %v382
  %v384 = vpop.f32.mrb[0].mxu0
  %385 = vmatprep.mubr.f32.mxu0 0.0
  %386 = vmatmul.mubr.f32.gmra.mrb[0].mxu0 %v226
  %v387 = vpop.f32.mrb[0].mxu0
  %v388 = vadd.f32 %v249, %v387
  %v389 = vpop.f32.mrb[0].mxu0
  %390 = vmatprep.mubr.f32.mxu0 0.0
  %391 = vmatmul.mubr.f32.gmra.mrb[0].mxu0 %v227
  %v392 = vpop.f32.mrb[0].mxu0
  %v393 = vadd.f32 %v249, %v392
  %v394 = vpop.f32.mrb[0].mxu0
  %395 = vdwg.mxu0
  %v396 = vmax.f32 %v318, 0.0
  %v397 = vmax.f32 %v323, 0.0
  %v398 = vmax.f32 %v328, 0.0
  %v399 = vmax.f32 %v333, 0.0
  %v400 = vmax.f32 %v338, 0.0
  %v401 = vmax.f32 %v343, 0.0
  %v402 = vmax.f32 %v348, 0.0
  %v403 = vmax.f32 %v353, 0.0
  %v404 = vmax.f32 %v358, 0.0
  %v405 = vmax.f32 %v363, 0.0
  %v406 = vmax.f32 %v368, 0.0
  %v407 = vmax.f32 %v373, 0.0
  %v408 = vmax.f32 %v378, 0.0
  %v409 = vmax.f32 %v383, 0.0
  %v410 = vmax.f32 %v388, 0.0
  %v411 = vmax.f32 %v393, 0.0
  %v412 = vld [vmem:[%s5] sm:$0xff]
  %v413 = vld [vmem:[%s5 + $0x8] sm:$0xff]
  %v414 = vld [vmem:[%s5 + $0x10] sm:$0xff]
  %v415 = vld [vmem:[%s5 + $0x18] sm:$0xff]
  %v416 = vld [vmem:[%s5 + $0x20] sm:$0xff]
  %v417 = vld [vmem:[%s5 + $0x28] sm:$0xff]
  %v418 = vld [vmem:[%s5 + $0x30] sm:$0xff]
  %v419 = vld [vmem:[%s5 + $0x38] sm:$0xff]
  %v420 = vld [vmem:[%s5 + $0x40] sm:$0xff]
  %v421 = vld [vmem:[%s5 + $0x48] sm:$0xff]
  %v422 = vld [vmem:[%s5 + $0x50] sm:$0xff]
  %v423 = vld [vmem:[%s5 + $0x58] sm:$0xff]
  %v424 = vld [vmem:[%s5 + $0x60] sm:$0xff]
  %v425 = vld [vmem:[%s5 + $0x68] sm:$0xff]
  %v426 = vld [vmem:[%s5 + $0x70] sm:$0xff]
  %v427 = vld [vmem:[%s5 + $0x78] sm:$0xff]
  %v428 = vld [vmem:[%s5 + $0x80] sm:$0xff]
  %v429 = vld [vmem:[%s5 + $0x88] sm:$0xff]
  %v430 = vld [vmem:[%s5 + $0x90] sm:$0xff]
  %v431 = vld [vmem:[%s5 + $0x98] sm:$0xff]
  %v432 = vld [vmem:[%s5 + $0xa0] sm:$0xff]
  %v433 = vld [vmem:[%s5 + $0xa8] sm:$0xff]
  %v434 = vld [vmem:[%s5 + $0xb0] sm:$0xff]
  %v435 = vld [vmem:[%s5 + $0xb8] sm:$0xff]
  %v436 = vld [vmem:[%s5 + $0xc0] sm:$0xff]
  %v437 = vld [vmem:[%s5 + $0xc8] sm:$0xff]
  %v438 = vld [vmem:[%s5 + $0xd0] sm:$0xff]
  %v439 = vld [vmem:[%s5 + $0xd8] sm:$0xff]
  %v440 = vld [vmem:[%s5 + $0xe0] sm:$0xff]
  %v441 = vld [vmem:[%s5 + $0xe8] sm:$0xff]
  %v442 = vld [vmem:[%s5 + $0xf0] sm:$0xff]
  %v443 = vld [vmem:[%s5 + $0xf8] sm:$0xff]
  %v444 = vld [vmem:[%s6] sm:$0x3]
  %v446 = vlaneseq
  %v447 = vshrl.u32 %v446, 7
  %v448 = vsub.s32 0, %v447
  %v449 = vrot.slane %v444, %v448
  %v450 = vlaneseq
  %v451 = vshrl.u32 %v450, 7
  %v452 = vsub.s32 1, %v451
  %v453 = vrot.slane %v444, %v452
  %456 = vmatprep.subr.mxu0 %v413
  %457 = vmatpush1.msra.mxu0 %v412
  %458 = vmatprep.subr.mxu0 %v415
  %459 = vmatpush1.msra.mxu0 %v414
  %460 = vmatprep.subr.mxu0 %v417
  %461 = vmatpush1.msra.mxu0 %v416
  %462 = vmatprep.subr.mxu0 %v419
  %463 = vmatpush1.msra.mxu0 %v418
  %464 = vmatprep.subr.mxu0 %v421
  %465 = vmatpush1.msra.mxu0 %v420
  %466 = vmatprep.subr.mxu0 %v423
  %467 = vmatpush1.msra.mxu0 %v422
  %468 = vmatprep.subr.mxu0 %v425
  %469 = vmatpush1.msra.mxu0 %v424
  %470 = vmatprep.subr.mxu0 %v427
  %471 = vmatpush1.msra.mxu0 %v426
  %472 = vmatprep.subr.mxu0 %v429
  %473 = vmatpush1.msra.mxu0 %v428
  %474 = vmatprep.subr.mxu0 %v431
  %475 = vmatpush1.msra.mxu0 %v430
  %476 = vmatprep.subr.mxu0 %v433
  %477 = vmatpush1.msra.mxu0 %v432
  %478 = vmatprep.subr.mxu0 %v435
  %479 = vmatpush1.msra.mxu0 %v434
  %480 = vmatprep.subr.mxu0 %v437
  %481 = vmatpush1.msra.mxu0 %v436
  %482 = vmatprep.subr.mxu0 %v439
  %483 = vmatpush1.msra.mxu0 %v438
  %484 = vmatprep.subr.mxu0 %v441
  %485 = vmatpush1.msra.mxu0 %v440
  %486 = vmatprep.subr.mxu0 %v443
  %487 = vmatpush1.msra.mxu0 %v442
  %488 = vmatprep.subr.mxu0 0.0
  %489 = vmatpush1.msra.mxu0 0.0
  %490 = vmatprep.subr.mxu0 0.0
  %491 = vmatpush1.msra.mxu0 0.0
  %492 = vmatprep.subr.mxu0 0.0
  %493 = vmatpush1.msra.mxu0 0.0
  %494 = vmatprep.subr.mxu0 0.0
  %495 = vmatpush1.msra.mxu0 0.0
  %496 = vmatprep.subr.mxu0 0.0
  %497 = vmatpush1.msra.mxu0 0.0
  %498 = vmatprep.subr.mxu0 0.0
  %499 = vmatpush1.msra.mxu0 0.0
  %500 = vmatprep.subr.mxu0 0.0
  %501 = vmatpush1.msra.mxu0 0.0
  %502 = vmatprep.subr.mxu0 0.0
  %503 = vmatpush1.msra.mxu0 0.0
  %504 = vmatprep.subr.mxu0 0.0
  %505 = vmatpush1.msra.mxu0 0.0
  %506 = vmatprep.subr.mxu0 0.0
  %507 = vmatpush1.msra.mxu0 0.0
  %508 = vmatprep.subr.mxu0 0.0
  %509 = vmatpush1.msra.mxu0 0.0
  %510 = vmatprep.subr.mxu0 0.0
  %511 = vmatpush1.msra.mxu0 0.0
  %512 = vmatprep.subr.mxu0 0.0
  %513 = vmatpush1.msra.mxu0 0.0
  %514 = vmatprep.subr.mxu0 0.0
  %515 = vmatpush1.msra.mxu0 0.0
  %516 = vmatprep.subr.mxu0 0.0
  %517 = vmatpush1.msra.mxu0 0.0
  %518 = vmatprep.subr.mxu0 0.0
  %519 = vmatpush1.msra.mxu0 0.0
  %520 = vmatprep.mubr.f32.mxu0 0.0
  %521 = vmatmul.mubr.f32.gmra.mrb[0].mxu0 %v396
  %v522 = vpop.f32.mrb[0].mxu0
  %v523 = vadd.f32 %v449, %v522
  %v524 = vpop.f32.mrb[0].mxu0
  %v525 = vadd.f32 %v453, %v524
  %526 = vmatprep.mubr.f32.mxu0 0.0
  %527 = vmatmul.mubr.f32.gmra.mrb[0].mxu0 %v397
  %v528 = vpop.f32.mrb[0].mxu0
  %v529 = vadd.f32 %v449, %v528
  %v530 = vpop.f32.mrb[0].mxu0
  %v531 = vadd.f32 %v453, %v530
  %532 = vmatprep.mubr.f32.mxu0 0.0
  %533 = vmatmul.mubr.f32.gmra.mrb[0].mxu0 %v398
  %v534 = vpop.f32.mrb[0].mxu0
  %v535 = vadd.f32 %v449, %v534
  %v536 = vpop.f32.mrb[0].mxu0
  %v537 = vadd.f32 %v453, %v536
  %538 = vmatprep.mubr.f32.mxu0 0.0
  %539 = vmatmul.mubr.f32.gmra.mrb[0].mxu0 %v399
  %v540 = vpop.f32.mrb[0].mxu0
  %v541 = vadd.f32 %v449, %v540
  %v542 = vpop.f32.mrb[0].mxu0
  %v543 = vadd.f32 %v453, %v542
  %544 = vmatprep.mubr.f32.mxu0 0.0
  %545 = vmatmul.mubr.f32.gmra.mrb[0].mxu0 %v400
  %v546 = vpop.f32.mrb[0].mxu0
  %v547 = vadd.f32 %v449, %v546
  %v548 = vpop.f32.mrb[0].mxu0
  %v549 = vadd.f32 %v453, %v548
  %550 = vmatprep.mubr.f32.mxu0 0.0
  %551 = vmatmul.mubr.f32.gmra.mrb[0].mxu0 %v401
  %v552 = vpop.f32.mrb[0].mxu0
  %v553 = vadd.f32 %v449, %v552
  %v554 = vpop.f32.mrb[0].mxu0
  %v555 = vadd.f32 %v453, %v554
  %556 = vmatprep.mubr.f32.mxu0 0.0
  %557 = vmatmul.mubr.f32.gmra.mrb[0].mxu0 %v402
  %v558 = vpop.f32.mrb[0].mxu0
  %v559 = vadd.f32 %v449, %v558
  %v560 = vpop.f32.mrb[0].mxu0
  %v561 = vadd.f32 %v453, %v560
  %562 = vmatprep.mubr.f32.mxu0 0.0
  %563 = vmatmul.mubr.f32.gmra.mrb[0].mxu0 %v403
  %v564 = vpop.f32.mrb[0].mxu0
  %v565 = vadd.f32 %v449, %v564
  %v566 = vpop.f32.mrb[0].mxu0
  %v567 = vadd.f32 %v453, %v566
  %568 = vmatprep.mubr.f32.mxu0 0.0
  %569 = vmatmul.mubr.f32.gmra.mrb[0].mxu0 %v404
  %v570 = vpop.f32.mrb[0].mxu0
  %v571 = vadd.f32 %v449, %v570
  %v572 = vpop.f32.mrb[0].mxu0
  %v573 = vadd.f32 %v453, %v572
  %574 = vmatprep.mubr.f32.mxu0 0.0
  %575 = vmatmul.mubr.f32.gmra.mrb[0].mxu0 %v405
  %v576 = vpop.f32.mrb[0].mxu0
  %v577 = vadd.f32 %v449, %v576
  %v578 = vpop.f32.mrb[0].mxu0
  %v579 = vadd.f32 %v453, %v578
  %580 = vmatprep.mubr.f32.mxu0 0.0
  %581 = vmatmul.mubr.f32.gmra.mrb[0].mxu0 %v406
  %v582 = vpop.f32.mrb[0].mxu0
  %v583 = vadd.f32 %v449, %v582
  %v584 = vpop.f32.mrb[0].mxu0
  %v585 = vadd.f32 %v453, %v584
  %586 = vmatprep.mubr.f32.mxu0 0.0
  %587 = vmatmul.mubr.f32.gmra.mrb[0].mxu0 %v407
  %v588 = vpop.f32.mrb[0].mxu0
  %v589 = vadd.f32 %v449, %v588
  %v590 = vpop.f32.mrb[0].mxu0
  %v591 = vadd.f32 %v453, %v590
  %592 = vmatprep.mubr.f32.mxu0 0.0
  %593 = vmatmul.mubr.f32.gmra.mrb[0].mxu0 %v408
  %v594 = vpop.f32.mrb[0].mxu0
  %v595 = vadd.f32 %v449, %v594
  %v596 = vpop.f32.mrb[0].mxu0
  %v597 = vadd.f32 %v453, %v596
  %598 = vmatprep.mubr.f32.mxu0 0.0
  %599 = vmatmul.mubr.f32.gmra.mrb[0].mxu0 %v409
  %v600 = vpop.f32.mrb[0].mxu0
  %v601 = vadd.f32 %v449, %v600
  %v602 = vpop.f32.mrb[0].mxu0
  %v603 = vadd.f32 %v453, %v602
  %604 = vmatprep.mubr.f32.mxu0 0.0
  %605 = vmatmul.mubr.f32.gmra.mrb[0].mxu0 %v410
  %v606 = vpop.f32.mrb[0].mxu0
  %v607 = vadd.f32 %v449, %v606
  %v608 = vpop.f32.mrb[0].mxu0
  %v609 = vadd.f32 %v453, %v608
  %610 = vmatprep.mubr.f32.mxu0 0.0
  %611 = vmatmul.mubr.f32.gmra.mrb[0].mxu0 %v411
  %v612 = vpop.f32.mrb[0].mxu0
  %v613 = vadd.f32 %v449, %v612
  %v614 = vpop.f32.mrb[0].mxu0
  %v615 = vadd.f32 %v453, %v614
  %616 = vdwg.mxu0
  %617 = vst [vmem:[%s7] sm:$0xff] %v523
  %618 = vst [vmem:[%s7 + $0x8] sm:$0xff] %v529
  %619 = vst [vmem:[%s7 + $0x10] sm:$0xff] %v535
  %620 = vst [vmem:[%s7 + $0x18] sm:$0xff] %v541
  %621 = vst [vmem:[%s7 + $0x20] sm:$0xff] %v547
  %622 = vst [vmem:[%s7 + $0x28] sm:$0xff] %v553
  %623 = vst [vmem:[%s7 + $0x30] sm:$0xff] %v559
  %624 = vst [vmem:[%s7 + $0x38] sm:$0xff] %v565
  %625 = vst [vmem:[%s7 + $0x40] sm:$0xff] %v571
  %626 = vst [vmem:[%s7 + $0x48] sm:$0xff] %v577
  %627 = vst [vmem:[%s7 + $0x50] sm:$0xff] %v583
  %628 = vst [vmem:[%s7 + $0x58] sm:$0xff] %v589
  %629 = vst [vmem:[%s7 + $0x60] sm:$0xff] %v595
  %630 = vst [vmem:[%s7 + $0x68] sm:$0xff] %v601
  %631 = vst [vmem:[%s7 + $0x70] sm:$0xff] %v607
  %632 = vst [vmem:[%s7 + $0x78] sm:$0xff] %v613
  %633 = vst [vmem:[%s8] sm:$0xff] %v525
  %634 = vst [vmem:[%s8 + $0x8] sm:$0xff] %v531
  %635 = vst [vmem:[%s8 + $0x10] sm:$0xff] %v537
  %636 = vst [vmem:[%s8 + $0x18] sm:$0xff] %v543
  %637 = vst [vmem:[%s8 + $0x20] sm:$0xff] %v549
  %638 = vst [vmem:[%s8 + $0x28] sm:$0xff] %v555
  %639 = vst [vmem:[%s8 + $0x30] sm:$0xff] %v561
  %640 = vst [vmem:[%s8 + $0x38] sm:$0xff] %v567
  %641 = vst [vmem:[%s8 + $0x40] sm:$0xff] %v573
  %642 = vst [vmem:[%s8 + $0x48] sm:$0xff] %v579
  %643 = vst [vmem:[%s8 + $0x50] sm:$0xff] %v585
  %644 = vst [vmem:[%s8 + $0x58] sm:$0xff] %v591
  %645 = vst [vmem:[%s8 + $0x60] sm:$0xff] %v597
  %646 = vst [vmem:[%s8 + $0x68] sm:$0xff] %v603
  %647 = vst [vmem:[%s8 + $0x70] sm:$0xff] %v609
  %648 = vst [vmem:[%s8 + $0x78] sm:$0xff] %v615
  // Predicated region
  $region30: #{trend_block_forward.2} parent=0 // pred_check
    _
  $region31: #{trend_block_forward.2} parent=0 // pred_check_branch
    %650 = sbr.rel (0) target = $region33
  $region32: #{trend_block_forward.2} parent=0 // pred_region
    _
  $region33: #{trend_block_forward.2} parent=0 // pred_fallthru
    _
  // Predicated region
  $region34: #{trend_block_forward.2} parent=0 // pred_check
    _
  $region35: #{trend_block_forward.2} parent=0 // pred_check_branch
    %652 = sbr.rel (0) target = $region37
  $region36: #{trend_block_forward.2} parent=0 // pred_region
    _
  $region37: #{trend_block_forward.2} parent=0 // pred_fallthru
    _
  // Predicated region
  $region38: #{trend_block_forward.2} parent=0 // pred_check
    _
  $region39: #{trend_block_forward.2} parent=0 // pred_check_branch
    %654 = sbr.rel (0) target = $region41
  $region40: #{trend_block_forward.2} parent=0 // pred_region
    _
  $region41: #{trend_block_forward.2} parent=0 // pred_fallthru
    _
  // Predicated region
  $region42: #{trend_block_forward.2} parent=0 // pred_check
    _
  $region43: #{trend_block_forward.2} parent=0 // pred_check_branch
    %656 = sbr.rel (0) target = $region45
  $region44: #{trend_block_forward.2} parent=0 // pred_region
    _
  $region45: #{trend_block_forward.2} parent=0 // pred_fallthru
    _

// kernel: trend_block_forward.3
$region0: #{trend_block_forward.3}
  #allocation0 [shape = 'u32[]', space=smem, size = 0x4, offset = 0x4, fixed_abs, tag = 'smem constant byte address 0x4 - core index']
  #allocation1 [shape = 'u32[144,128]{1,0:T(1,128)}', space=vmem, size = 0x12000, scoped, tag = 'internal scratch']
  #allocation2 [shape = 'f32[128,128]{1,0:T(8,128)}', space=vmem, size = 0x10000, scoped, tag = 'scratch operand']
  %s0 = inlined_call_operand.vmem [shape: f32[128,128], index: 0, kind: input, shape index: {}]
  %s1 = inlined_call_operand.vmem [shape: f32[128,128], index: 1, kind: input, shape index: {}]
  %s2 = inlined_call_operand.vmem [shape: f32[128,128], index: 2, kind: input, shape index: {}]
  %s3 = inlined_call_operand.vmem [shape: f32[128,128], index: 3, kind: input, shape index: {}]
  %s4 = inlined_call_operand.vmem [shape: f32[128,128], index: 4, kind: input, shape index: {}]
  %s5 = inlined_call_operand.vmem [shape: f32[128,128], index: 5, kind: output, shape index: {}]
  %s6 = sld [smem:[#allocation0]]
  $region38: #{trend_block_forward.3} parent=0
    _
  %s8 = ssub.s32 1, %s6
  %s9 = scalar_select 0, %s8, %s6
  // Predicated region
  $region2: #{trend_block_forward.3} parent=0 // pred_check
    _
  $region3: #{trend_block_forward.3} parent=0 // pred_check_branch
    %11 = sbr.rel (0) target = $region5
  $region4: #{trend_block_forward.3} parent=0 // pred_region
    _
  $region5: #{trend_block_forward.3} parent=0 // pred_fallthru
    _
  // Predicated region
  $region6: #{trend_block_forward.3} parent=0 // pred_check
    _
  $region7: #{trend_block_forward.3} parent=0 // pred_check_branch
    %13 = sbr.rel (0) target = $region9
  $region8: #{trend_block_forward.3} parent=0 // pred_region
    _
  $region9: #{trend_block_forward.3} parent=0 // pred_fallthru
    _
  // Predicated region
  $region10: #{trend_block_forward.3} parent=0 // pred_check
    _
  $region11: #{trend_block_forward.3} parent=0 // pred_check_branch
    %15 = sbr.rel (0) target = $region13
  $region12: #{trend_block_forward.3} parent=0 // pred_region
    _
  $region13: #{trend_block_forward.3} parent=0 // pred_fallthru
    _
  // Predicated region
  $region14: #{trend_block_forward.3} parent=0 // pred_check
    _
  $region15: #{trend_block_forward.3} parent=0 // pred_check_branch
    %17 = sbr.rel (0) target = $region17
  $region16: #{trend_block_forward.3} parent=0 // pred_region
    _
  $region17: #{trend_block_forward.3} parent=0 // pred_fallthru
    _
  // Predicated region
  $region18: #{trend_block_forward.3} parent=0 // pred_check
    _
  $region19: #{trend_block_forward.3} parent=0 // pred_check_branch
    %19 = sbr.rel (0) target = $region21
  $region20: #{trend_block_forward.3} parent=0 // pred_region
    _
  $region21: #{trend_block_forward.3} parent=0 // pred_fallthru
    _
  %p20 = scmp.eq.s32.totalorder 0, 0
  // Predicated region
  $region22: #{trend_block_forward.3} parent=0 // pred_check
    %p21 = pneg %p20
  $region23: #{trend_block_forward.3} parent=0 // pred_check_branch
    %23 = sbr.rel (%p21) target = $region25
  $region24: #{trend_block_forward.3} parent=0 // pred_region
    %24 = vst [vmem:[#allocation2] sm:$0xff] 0.0
    %25 = vst [vmem:[#allocation2 + $0x8] sm:$0xff] 0.0
    %26 = vst [vmem:[#allocation2 + $0x10] sm:$0xff] 0.0
    %27 = vst [vmem:[#allocation2 + $0x18] sm:$0xff] 0.0
    %28 = vst [vmem:[#allocation2 + $0x20] sm:$0xff] 0.0
    %29 = vst [vmem:[#allocation2 + $0x28] sm:$0xff] 0.0
    %30 = vst [vmem:[#allocation2 + $0x30] sm:$0xff] 0.0
    %31 = vst [vmem:[#allocation2 + $0x38] sm:$0xff] 0.0
    %32 = vst [vmem:[#allocation2 + $0x40] sm:$0xff] 0.0
    %33 = vst [vmem:[#allocation2 + $0x48] sm:$0xff] 0.0
    %34 = vst [vmem:[#allocation2 + $0x50] sm:$0xff] 0.0
    %35 = vst [vmem:[#allocation2 + $0x58] sm:$0xff] 0.0
    %36 = vst [vmem:[#allocation2 + $0x60] sm:$0xff] 0.0
    %37 = vst [vmem:[#allocation2 + $0x68] sm:$0xff] 0.0
    %38 = vst [vmem:[#allocation2 + $0x70] sm:$0xff] 0.0
    %39 = vst [vmem:[#allocation2 + $0x78] sm:$0xff] 0.0
  $region25: #{trend_block_forward.3} parent=0 // pred_fallthru
    _
  %v40 = vld [vmem:[#allocation2] sm:$0xff]
  %v41 = vld [vmem:[#allocation2 + $0x8] sm:$0xff]
  %v42 = vld [vmem:[#allocation2 + $0x10] sm:$0xff]
  %v43 = vld [vmem:[#allocation2 + $0x18] sm:$0xff]
  %v44 = vld [vmem:[#allocation2 + $0x20] sm:$0xff]
  %v45 = vld [vmem:[#allocation2 + $0x28] sm:$0xff]
  %v46 = vld [vmem:[#allocation2 + $0x30] sm:$0xff]
  %v47 = vld [vmem:[#allocation2 + $0x38] sm:$0xff]
  %v48 = vld [vmem:[#allocation2 + $0x40] sm:$0xff]
  %v49 = vld [vmem:[#allocation2 + $0x48] sm:$0xff]
  %v50 = vld [vmem:[#allocation2 + $0x50] sm:$0xff]
  %v51 = vld [vmem:[#allocation2 + $0x58] sm:$0xff]
  %v52 = vld [vmem:[#allocation2 + $0x60] sm:$0xff]
  %v53 = vld [vmem:[#allocation2 + $0x68] sm:$0xff]
  %v54 = vld [vmem:[#allocation2 + $0x70] sm:$0xff]
  %v55 = vld [vmem:[#allocation2 + $0x78] sm:$0xff]
  %v56 = vld [vmem:[%s0] sm:$0xff]
  %v57 = vld [vmem:[%s0 + $0x8] sm:$0xff]
  %v58 = vld [vmem:[%s0 + $0x10] sm:$0xff]
  %v59 = vld [vmem:[%s0 + $0x18] sm:$0xff]
  %v60 = vld [vmem:[%s0 + $0x20] sm:$0xff]
  %v61 = vld [vmem:[%s0 + $0x28] sm:$0xff]
  %v62 = vld [vmem:[%s0 + $0x30] sm:$0xff]
  %v63 = vld [vmem:[%s0 + $0x38] sm:$0xff]
  %v64 = vld [vmem:[%s0 + $0x40] sm:$0xff]
  %v65 = vld [vmem:[%s0 + $0x48] sm:$0xff]
  %v66 = vld [vmem:[%s0 + $0x50] sm:$0xff]
  %v67 = vld [vmem:[%s0 + $0x58] sm:$0xff]
  %v68 = vld [vmem:[%s0 + $0x60] sm:$0xff]
  %v69 = vld [vmem:[%s0 + $0x68] sm:$0xff]
  %v70 = vld [vmem:[%s0 + $0x70] sm:$0xff]
  %v71 = vld [vmem:[%s0 + $0x78] sm:$0xff]
  %v72 = vld [vmem:[%s1] sm:$0xff]
  %v73 = vld [vmem:[%s1 + $0x8] sm:$0xff]
  %v74 = vld [vmem:[%s1 + $0x10] sm:$0xff]
  %v75 = vld [vmem:[%s1 + $0x18] sm:$0xff]
  %v76 = vld [vmem:[%s1 + $0x20] sm:$0xff]
  %v77 = vld [vmem:[%s1 + $0x28] sm:$0xff]
  %v78 = vld [vmem:[%s1 + $0x30] sm:$0xff]
  %v79 = vld [vmem:[%s1 + $0x38] sm:$0xff]
  %v80 = vld [vmem:[%s1 + $0x40] sm:$0xff]
  %v81 = vld [vmem:[%s1 + $0x48] sm:$0xff]
  %v82 = vld [vmem:[%s1 + $0x50] sm:$0xff]
  %v83 = vld [vmem:[%s1 + $0x58] sm:$0xff]
  %v84 = vld [vmem:[%s1 + $0x60] sm:$0xff]
  %v85 = vld [vmem:[%s1 + $0x68] sm:$0xff]
  %v86 = vld [vmem:[%s1 + $0x70] sm:$0xff]
  %v87 = vld [vmem:[%s1 + $0x78] sm:$0xff]
  %88 = vmatprep.subr.mxu0 0.0
  %89 = vmatpush1.msra.mxu0 %v72
  %90 = vmatprep.subr.mxu0 0.0
  %91 = vmatpush1.msra.mxu0 %v73
  %92 = vmatprep.subr.mxu0 0.0
  %93 = vmatpush1.msra.mxu0 %v74
  %94 = vmatprep.subr.mxu0 0.0
  %95 = vmatpush1.msra.mxu0 %v75
  %96 = vmatprep.subr.mxu0 0.0
  %97 = vmatpush1.msra.mxu0 %v76
  %98 = vmatprep.subr.mxu0 0.0
  %99 = vmatpush1.msra.mxu0 %v77
  %100 = vmatprep.subr.mxu0 0.0
  %101 = vmatpush1.msra.mxu0 %v78
  %102 = vmatprep.subr.mxu0 0.0
  %103 = vmatpush1.msra.mxu0 %v79
  %104 = vmatprep.subr.mxu0 0.0
  %105 = vmatpush1.msra.mxu0 %v80
  %106 = vmatprep.subr.mxu0 0.0
  %107 = vmatpush1.msra.mxu0 %v81
  %108 = vmatprep.subr.mxu0 0.0
  %109 = vmatpush1.msra.mxu0 %v82
  %110 = vmatprep.subr.mxu0 0.0
  %111 = vmatpush1.msra.mxu0 %v83
  %112 = vmatprep.subr.mxu0 0.0
  %113 = vmatpush1.msra.mxu0 %v84
  %114 = vmatprep.subr.mxu0 0.0
  %115 = vmatpush1.msra.mxu0 %v85
  %116 = vmatprep.subr.mxu0 0.0
  %117 = vmatpush1.msra.mxu0 %v86
  %118 = vmatprep.subr.mxu0 0.0
  %119 = vmatpush1.msra.mxu0 %v87
  %120 = vmatprep.subr.mxu0 0.0
  %121 = vmatpush1.msra.mxu0 0.0
  %122 = vmatprep.subr.mxu0 0.0
  %123 = vmatpush1.msra.mxu0 0.0
  %124 = vmatprep.subr.mxu0 0.0
  %125 = vmatpush1.msra.mxu0 0.0
  %126 = vmatprep.subr.mxu0 0.0
  %127 = vmatpush1.msra.mxu0 0.0
  %128 = vmatprep.subr.mxu0 0.0
  %129 = vmatpush1.msra.mxu0 0.0
  %130 = vmatprep.subr.mxu0 0.0
  %131 = vmatpush1.msra.mxu0 0.0
  %132 = vmatprep.subr.mxu0 0.0
  %133 = vmatpush1.msra.mxu0 0.0
  %134 = vmatprep.subr.mxu0 0.0
  %135 = vmatpush1.msra.mxu0 0.0
  %136 = vmatprep.subr.mxu0 0.0
  %137 = vmatpush1.msra.mxu0 0.0
  %138 = vmatprep.subr.mxu0 0.0
  %139 = vmatpush1.msra.mxu0 0.0
  %140 = vmatprep.subr.mxu0 0.0
  %141 = vmatpush1.msra.mxu0 0.0
  %142 = vmatprep.subr.mxu0 0.0
  %143 = vmatpush1.msra.mxu0 0.0
  %144 = vmatprep.subr.mxu0 0.0
  %145 = vmatpush1.msra.mxu0 0.0
  %146 = vmatprep.subr.mxu0 0.0
  %147 = vmatpush1.msra.mxu0 0.0
  %148 = vmatprep.subr.mxu0 0.0
  %149 = vmatpush1.msra.mxu0 0.0
  %150 = vmatprep.subr.mxu0 0.0
  %151 = vmatpush1.msra.mxu0 0.0
  %152 = vmatprep.mubr.f32.mxu0 0.0
  %153 = vmatmul.mubr.f32.gmra.mrb[0].mxu0 %v56
  %v154 = vpop.f32.mrb[0].mxu0
  %v155 = vadd.f32 0.0, %v154
  %v156 = vpop.f32.mrb[0].mxu0
  %157 = vmatprep.mubr.f32.mxu0 0.0
  %158 = vmatmul.mubr.f32.gmra.mrb[0].mxu0 %v57
  %v159 = vpop.f32.mrb[0].mxu0
  %v160 = vadd.f32 0.0, %v159
  %v161 = vpop.f32.mrb[0].mxu0
  %162 = vmatprep.mubr.f32.mxu0 0.0
  %163 = vmatmul.mubr.f32.gmra.mrb[0].mxu0 %v58
  %v164 = vpop.f32.mrb[0].mxu0
  %v165 = vadd.f32 0.0, %v164
  %v166 = vpop.f32.mrb[0].mxu0
  %167 = vmatprep.mubr.f32.mxu0 0.0
  %168 = vmatmul.mubr.f32.gmra.mrb[0].mxu0 %v59
  %v169 = vpop.f32.mrb[0].mxu0
  %v170 = vadd.f32 0.0, %v169
  %v171 = vpop.f32.mrb[0].mxu0
  %172 = vmatprep.mubr.f32.mxu0 0.0
  %173 = vmatmul.mubr.f32.gmra.mrb[0].mxu0 %v60
  %v174 = vpop.f32.mrb[0].mxu0
  %v175 = vadd.f32 0.0, %v174
  %v176 = vpop.f32.mrb[0].mxu0
  %177 = vmatprep.mubr.f32.mxu0 0.0
  %178 = vmatmul.mubr.f32.gmra.mrb[0].mxu0 %v61
  %v179 = vpop.f32.mrb[0].mxu0
  %v180 = vadd.f32 0.0, %v179
  %v181 = vpop.f32.mrb[0].mxu0
  %182 = vmatprep.mubr.f32.mxu0 0.0
  %183 = vmatmul.mubr.f32.gmra.mrb[0].mxu0 %v62
  %v184 = vpop.f32.mrb[0].mxu0
  %v185 = vadd.f32 0.0, %v184
  %v186 = vpop.f32.mrb[0].mxu0
  %187 = vmatprep.mubr.f32.mxu0 0.0
  %188 = vmatmul.mubr.f32.gmra.mrb[0].mxu0 %v63
  %v189 = vpop.f32.mrb[0].mxu0
  %v190 = vadd.f32 0.0, %v189
  %v191 = vpop.f32.mrb[0].mxu0
  %192 = vmatprep.mubr.f32.mxu0 0.0
  %193 = vmatmul.mubr.f32.gmra.mrb[0].mxu0 %v64
  %v194 = vpop.f32.mrb[0].mxu0
  %v195 = vadd.f32 0.0, %v194
  %v196 = vpop.f32.mrb[0].mxu0
  %197 = vmatprep.mubr.f32.mxu0 0.0
  %198 = vmatmul.mubr.f32.gmra.mrb[0].mxu0 %v65
  %v199 = vpop.f32.mrb[0].mxu0
  %v200 = vadd.f32 0.0, %v199
  %v201 = vpop.f32.mrb[0].mxu0
  %202 = vmatprep.mubr.f32.mxu0 0.0
  %203 = vmatmul.mubr.f32.gmra.mrb[0].mxu0 %v66
  %v204 = vpop.f32.mrb[0].mxu0
  %v205 = vadd.f32 0.0, %v204
  %v206 = vpop.f32.mrb[0].mxu0
  %207 = vmatprep.mubr.f32.mxu0 0.0
  %208 = vmatmul.mubr.f32.gmra.mrb[0].mxu0 %v67
  %v209 = vpop.f32.mrb[0].mxu0
  %v210 = vadd.f32 0.0, %v209
  %v211 = vpop.f32.mrb[0].mxu0
  %212 = vmatprep.mubr.f32.mxu0 0.0
  %213 = vmatmul.mubr.f32.gmra.mrb[0].mxu0 %v68
  %v214 = vpop.f32.mrb[0].mxu0
  %v215 = vadd.f32 0.0, %v214
  %v216 = vpop.f32.mrb[0].mxu0
  %217 = vmatprep.mubr.f32.mxu0 0.0
  %218 = vmatmul.mubr.f32.gmra.mrb[0].mxu0 %v69
  %v219 = vpop.f32.mrb[0].mxu0
  %v220 = vadd.f32 0.0, %v219
  %v221 = vpop.f32.mrb[0].mxu0
  %222 = vmatprep.mubr.f32.mxu0 0.0
  %223 = vmatmul.mubr.f32.gmra.mrb[0].mxu0 %v70
  %v224 = vpop.f32.mrb[0].mxu0
  %v225 = vadd.f32 0.0, %v224
  %v226 = vpop.f32.mrb[0].mxu0
  %227 = vmatprep.mubr.f32.mxu0 0.0
  %228 = vmatmul.mubr.f32.gmra.mrb[0].mxu0 %v71
  %v229 = vpop.f32.mrb[0].mxu0
  %v230 = vadd.f32 0.0, %v229
  %v231 = vpop.f32.mrb[0].mxu0
  %232 = vdwg.mxu0
  %v233 = vadd.f32 %v40, %v155
  %v234 = vadd.f32 %v41, %v160
  %v235 = vadd.f32 %v42, %v165
  %v236 = vadd.f32 %v43, %v170
  %v237 = vadd.f32 %v44, %v175
  %v238 = vadd.f32 %v45, %v180
  %v239 = vadd.f32 %v46, %v185
  %v240 = vadd.f32 %v47, %v190
  %v241 = vadd.f32 %v48, %v195
  %v242 = vadd.f32 %v49, %v200
  %v243 = vadd.f32 %v50, %v205
  %v244 = vadd.f32 %v51, %v210
  %v245 = vadd.f32 %v52, %v215
  %v246 = vadd.f32 %v53, %v220
  %v247 = vadd.f32 %v54, %v225
  %v248 = vadd.f32 %v55, %v230
  %249 = vst [vmem:[#allocation2] sm:$0xff] %v233
  %250 = vst [vmem:[#allocation2 + $0x8] sm:$0xff] %v234
  %251 = vst [vmem:[#allocation2 + $0x10] sm:$0xff] %v235
  %252 = vst [vmem:[#allocation2 + $0x18] sm:$0xff] %v236
  %253 = vst [vmem:[#allocation2 + $0x20] sm:$0xff] %v237
  %254 = vst [vmem:[#allocation2 + $0x28] sm:$0xff] %v238
  %255 = vst [vmem:[#allocation2 + $0x30] sm:$0xff] %v239
  %256 = vst [vmem:[#allocation2 + $0x38] sm:$0xff] %v240
  %257 = vst [vmem:[#allocation2 + $0x40] sm:$0xff] %v241
  %258 = vst [vmem:[#allocation2 + $0x48] sm:$0xff] %v242
  %259 = vst [vmem:[#allocation2 + $0x50] sm:$0xff] %v243
  %260 = vst [vmem:[#allocation2 + $0x58] sm:$0xff] %v244
  %261 = vst [vmem:[#allocation2 + $0x60] sm:$0xff] %v245
  %262 = vst [vmem:[#allocation2 + $0x68] sm:$0xff] %v246
  %263 = vst [vmem:[#allocation2 + $0x70] sm:$0xff] %v247
  %264 = vst [vmem:[#allocation2 + $0x78] sm:$0xff] %v248
  // Predicated region
  $region26: #{trend_block_forward.3} parent=0 // pred_check
    %p265 = pneg %p20
  $region27: #{trend_block_forward.3} parent=0 // pred_check_branch
    %267 = sbr.rel (%p265) target = $region29
  $region28: #{trend_block_forward.3} parent=0 // pred_region
    %v268 = vld [vmem:[%s2] sm:$0xff]
    %v269 = vld [vmem:[%s2 + $0x8] sm:$0xff]
    %v270 = vld [vmem:[%s2 + $0x10] sm:$0xff]
    %v271 = vld [vmem:[%s2 + $0x18] sm:$0xff]
    %v272 = vld [vmem:[%s2 + $0x20] sm:$0xff]
    %v273 = vld [vmem:[%s2 + $0x28] sm:$0xff]
    %v274 = vld [vmem:[%s2 + $0x30] sm:$0xff]
    %v275 = vld [vmem:[%s2 + $0x38] sm:$0xff]
    %v276 = vld [vmem:[%s2 + $0x40] sm:$0xff]
    %v277 = vld [vmem:[%s2 + $0x48] sm:$0xff]
    %v278 = vld [vmem:[%s2 + $0x50] sm:$0xff]
    %v279 = vld [vmem:[%s2 + $0x58] sm:$0xff]
    %v280 = vld [vmem:[%s2 + $0x60] sm:$0xff]
    %v281 = vld [vmem:[%s2 + $0x68] sm:$0xff]
    %v282 = vld [vmem:[%s2 + $0x70] sm:$0xff]
    %v283 = vld [vmem:[%s2 + $0x78] sm:$0xff]
    %v284 = vld [vmem:[#allocation2] sm:$0xff]
    %v285 = vld [vmem:[#allocation2 + $0x8] sm:$0xff]
    %v286 = vld [vmem:[#allocation2 + $0x10] sm:$0xff]
    %v287 = vld [vmem:[#allocation2 + $0x18] sm:$0xff]
    %v288 = vld [vmem:[#allocation2 + $0x20] sm:$0xff]
    %v289 = vld [vmem:[#allocation2 + $0x28] sm:$0xff]
    %v290 = vld [vmem:[#allocation2 + $0x30] sm:$0xff]
    %v291 = vld [vmem:[#allocation2 + $0x38] sm:$0xff]
    %v292 = vld [vmem:[#allocation2 + $0x40] sm:$0xff]
    %v293 = vld [vmem:[#allocation2 + $0x48] sm:$0xff]
    %v294 = vld [vmem:[#allocation2 + $0x50] sm:$0xff]
    %v295 = vld [vmem:[#allocation2 + $0x58] sm:$0xff]
    %v296 = vld [vmem:[#allocation2 + $0x60] sm:$0xff]
    %v297 = vld [vmem:[#allocation2 + $0x68] sm:$0xff]
    %v298 = vld [vmem:[#allocation2 + $0x70] sm:$0xff]
    %v299 = vld [vmem:[#allocation2 + $0x78] sm:$0xff]
    %v300 = vadd.f32 %v268, %v284
    %v301 = vadd.f32 %v269, %v285
    %v302 = vadd.f32 %v270, %v286
    %v303 = vadd.f32 %v271, %v287
    %v304 = vadd.f32 %v272, %v288
    %v305 = vadd.f32 %v273, %v289
    %v306 = vadd.f32 %v274, %v290
    %v307 = vadd.f32 %v275, %v291
    %v308 = vadd.f32 %v276, %v292
    %v309 = vadd.f32 %v277, %v293
    %v310 = vadd.f32 %v278, %v294
    %v311 = vadd.f32 %v279, %v295
    %v312 = vadd.f32 %v280, %v296
    %v313 = vadd.f32 %v281, %v297
    %v314 = vadd.f32 %v282, %v298
    %v315 = vadd.f32 %v283, %v299
    %v316 = vmax.f32 %v300, 0.0
    %v317 = vmax.f32 %v301, 0.0
    %v318 = vmax.f32 %v302, 0.0
    %v319 = vmax.f32 %v303, 0.0
    %v320 = vmax.f32 %v304, 0.0
    %v321 = vmax.f32 %v305, 0.0
    %v322 = vmax.f32 %v306, 0.0
    %v323 = vmax.f32 %v307, 0.0
    %v324 = vmax.f32 %v308, 0.0
    %v325 = vmax.f32 %v309, 0.0
    %v326 = vmax.f32 %v310, 0.0
    %v327 = vmax.f32 %v311, 0.0
    %v328 = vmax.f32 %v312, 0.0
    %v329 = vmax.f32 %v313, 0.0
    %v330 = vmax.f32 %v314, 0.0
    %v331 = vmax.f32 %v315, 0.0
    %v332 = vld [vmem:[%s3] sm:$0xff]
    %v333 = vld [vmem:[%s3 + $0x8] sm:$0xff]
    %v334 = vld [vmem:[%s3 + $0x10] sm:$0xff]
    %v335 = vld [vmem:[%s3 + $0x18] sm:$0xff]
    %v336 = vld [vmem:[%s3 + $0x20] sm:$0xff]
    %v337 = vld [vmem:[%s3 + $0x28] sm:$0xff]
    %v338 = vld [vmem:[%s3 + $0x30] sm:$0xff]
    %v339 = vld [vmem:[%s3 + $0x38] sm:$0xff]
    %v340 = vld [vmem:[%s3 + $0x40] sm:$0xff]
    %v341 = vld [vmem:[%s3 + $0x48] sm:$0xff]
    %v342 = vld [vmem:[%s3 + $0x50] sm:$0xff]
    %v343 = vld [vmem:[%s3 + $0x58] sm:$0xff]
    %v344 = vld [vmem:[%s3 + $0x60] sm:$0xff]
    %v345 = vld [vmem:[%s3 + $0x68] sm:$0xff]
    %v346 = vld [vmem:[%s3 + $0x70] sm:$0xff]
    %v347 = vld [vmem:[%s3 + $0x78] sm:$0xff]
    %348 = vmatprep.subr.mxu0 0.0
    %349 = vmatpush1.msra.mxu0 %v332
    %350 = vmatprep.subr.mxu0 0.0
    %351 = vmatpush1.msra.mxu0 %v333
    %352 = vmatprep.subr.mxu0 0.0
    %353 = vmatpush1.msra.mxu0 %v334
    %354 = vmatprep.subr.mxu0 0.0
    %355 = vmatpush1.msra.mxu0 %v335
    %356 = vmatprep.subr.mxu0 0.0
    %357 = vmatpush1.msra.mxu0 %v336
    %358 = vmatprep.subr.mxu0 0.0
    %359 = vmatpush1.msra.mxu0 %v337
    %360 = vmatprep.subr.mxu0 0.0
    %361 = vmatpush1.msra.mxu0 %v338
    %362 = vmatprep.subr.mxu0 0.0
    %363 = vmatpush1.msra.mxu0 %v339
    %364 = vmatprep.subr.mxu0 0.0
    %365 = vmatpush1.msra.mxu0 %v340
    %366 = vmatprep.subr.mxu0 0.0
    %367 = vmatpush1.msra.mxu0 %v341
    %368 = vmatprep.subr.mxu0 0.0
    %369 = vmatpush1.msra.mxu0 %v342
    %370 = vmatprep.subr.mxu0 0.0
    %371 = vmatpush1.msra.mxu0 %v343
    %372 = vmatprep.subr.mxu0 0.0
    %373 = vmatpush1.msra.mxu0 %v344
    %374 = vmatprep.subr.mxu0 0.0
    %375 = vmatpush1.msra.mxu0 %v345
    %376 = vmatprep.subr.mxu0 0.0
    %377 = vmatpush1.msra.mxu0 %v346
    %378 = vmatprep.subr.mxu0 0.0
    %379 = vmatpush1.msra.mxu0 %v347
    %380 = vmatprep.subr.mxu0 0.0
    %381 = vmatpush1.msra.mxu0 0.0
    %382 = vmatprep.subr.mxu0 0.0
    %383 = vmatpush1.msra.mxu0 0.0
    %384 = vmatprep.subr.mxu0 0.0
    %385 = vmatpush1.msra.mxu0 0.0
    %386 = vmatprep.subr.mxu0 0.0
    %387 = vmatpush1.msra.mxu0 0.0
    %388 = vmatprep.subr.mxu0 0.0
    %389 = vmatpush1.msra.mxu0 0.0
    %390 = vmatprep.subr.mxu0 0.0
    %391 = vmatpush1.msra.mxu0 0.0
    %392 = vmatprep.subr.mxu0 0.0
    %393 = vmatpush1.msra.mxu0 0.0
    %394 = vmatprep.subr.mxu0 0.0
    %395 = vmatpush1.msra.mxu0 0.0
    %396 = vmatprep.subr.mxu0 0.0
    %397 = vmatpush1.msra.mxu0 0.0
    %398 = vmatprep.subr.mxu0 0.0
    %399 = vmatpush1.msra.mxu0 0.0
    %400 = vmatprep.subr.mxu0 0.0
    %401 = vmatpush1.msra.mxu0 0.0
    %402 = vmatprep.subr.mxu0 0.0
    %403 = vmatpush1.msra.mxu0 0.0
    %404 = vmatprep.subr.mxu0 0.0
    %405 = vmatpush1.msra.mxu0 0.0
    %406 = vmatprep.subr.mxu0 0.0
    %407 = vmatpush1.msra.mxu0 0.0
    %408 = vmatprep.subr.mxu0 0.0
    %409 = vmatpush1.msra.mxu0 0.0
    %410 = vmatprep.subr.mxu0 0.0
    %411 = vmatpush1.msra.mxu0 0.0
    %412 = vmatprep.mubr.f32.mxu0 0.0
    %413 = vmatmul.mubr.f32.gmra.mrb[0].mxu0 %v316
    %v414 = vpop.f32.mrb[0].mxu0
    %v415 = vadd.f32 0.0, %v414
    %v416 = vpop.f32.mrb[0].mxu0
    %417 = vmatprep.mubr.f32.mxu0 0.0
    %418 = vmatmul.mubr.f32.gmra.mrb[0].mxu0 %v317
    %v419 = vpop.f32.mrb[0].mxu0
    %v420 = vadd.f32 0.0, %v419
    %v421 = vpop.f32.mrb[0].mxu0
    %422 = vmatprep.mubr.f32.mxu0 0.0
    %423 = vmatmul.mubr.f32.gmra.mrb[0].mxu0 %v318
    %v424 = vpop.f32.mrb[0].mxu0
    %v425 = vadd.f32 0.0, %v424
    %v426 = vpop.f32.mrb[0].mxu0
    %427 = vmatprep.mubr.f32.mxu0 0.0
    %428 = vmatmul.mubr.f32.gmra.mrb[0].mxu0 %v319
    %v429 = vpop.f32.mrb[0].mxu0
    %v430 = vadd.f32 0.0, %v429
    %v431 = vpop.f32.mrb[0].mxu0
    %432 = vmatprep.mubr.f32.mxu0 0.0
    %433 = vmatmul.mubr.f32.gmra.mrb[0].mxu0 %v320
    %v434 = vpop.f32.mrb[0].mxu0
    %v435 = vadd.f32 0.0, %v434
    %v436 = vpop.f32.mrb[0].mxu0
    %437 = vmatprep.mubr.f32.mxu0 0.0
    %438 = vmatmul.mubr.f32.gmra.mrb[0].mxu0 %v321
    %v439 = vpop.f32.mrb[0].mxu0
    %v440 = vadd.f32 0.0, %v439
    %v441 = vpop.f32.mrb[0].mxu0
    %442 = vmatprep.mubr.f32.mxu0 0.0
    %443 = vmatmul.mubr.f32.gmra.mrb[0].mxu0 %v322
    %v444 = vpop.f32.mrb[0].mxu0
    %v445 = vadd.f32 0.0, %v444
    %v446 = vpop.f32.mrb[0].mxu0
    %447 = vmatprep.mubr.f32.mxu0 0.0
    %448 = vmatmul.mubr.f32.gmra.mrb[0].mxu0 %v323
    %v449 = vpop.f32.mrb[0].mxu0
    %v450 = vadd.f32 0.0, %v449
    %v451 = vpop.f32.mrb[0].mxu0
    %452 = vmatprep.mubr.f32.mxu0 0.0
    %453 = vmatmul.mubr.f32.gmra.mrb[0].mxu0 %v324
    %v454 = vpop.f32.mrb[0].mxu0
    %v455 = vadd.f32 0.0, %v454
    %v456 = vpop.f32.mrb[0].mxu0
    %457 = vmatprep.mubr.f32.mxu0 0.0
    %458 = vmatmul.mubr.f32.gmra.mrb[0].mxu0 %v325
    %v459 = vpop.f32.mrb[0].mxu0
    %v460 = vadd.f32 0.0, %v459
    %v461 = vpop.f32.mrb[0].mxu0
    %462 = vmatprep.mubr.f32.mxu0 0.0
    %463 = vmatmul.mubr.f32.gmra.mrb[0].mxu0 %v326
    %v464 = vpop.f32.mrb[0].mxu0
    %v465 = vadd.f32 0.0, %v464
    %v466 = vpop.f32.mrb[0].mxu0
    %467 = vmatprep.mubr.f32.mxu0 0.0
    %468 = vmatmul.mubr.f32.gmra.mrb[0].mxu0 %v327
    %v469 = vpop.f32.mrb[0].mxu0
    %v470 = vadd.f32 0.0, %v469
    %v471 = vpop.f32.mrb[0].mxu0
    %472 = vmatprep.mubr.f32.mxu0 0.0
    %473 = vmatmul.mubr.f32.gmra.mrb[0].mxu0 %v328
    %v474 = vpop.f32.mrb[0].mxu0
    %v475 = vadd.f32 0.0, %v474
    %v476 = vpop.f32.mrb[0].mxu0
    %477 = vmatprep.mubr.f32.mxu0 0.0
    %478 = vmatmul.mubr.f32.gmra.mrb[0].mxu0 %v329
    %v479 = vpop.f32.mrb[0].mxu0
    %v480 = vadd.f32 0.0, %v479
    %v481 = vpop.f32.mrb[0].mxu0
    %482 = vmatprep.mubr.f32.mxu0 0.0
    %483 = vmatmul.mubr.f32.gmra.mrb[0].mxu0 %v330
    %v484 = vpop.f32.mrb[0].mxu0
    %v485 = vadd.f32 0.0, %v484
    %v486 = vpop.f32.mrb[0].mxu0
    %487 = vmatprep.mubr.f32.mxu0 0.0
    %488 = vmatmul.mubr.f32.gmra.mrb[0].mxu0 %v331
    %v489 = vpop.f32.mrb[0].mxu0
    %v490 = vadd.f32 0.0, %v489
    %v491 = vpop.f32.mrb[0].mxu0
    %492 = vdwg.mxu0
    %v493 = vld [vmem:[%s4] sm:$0xff]
    %v494 = vld [vmem:[%s4 + $0x8] sm:$0xff]
    %v495 = vld [vmem:[%s4 + $0x10] sm:$0xff]
    %v496 = vld [vmem:[%s4 + $0x18] sm:$0xff]
    %v497 = vld [vmem:[%s4 + $0x20] sm:$0xff]
    %v498 = vld [vmem:[%s4 + $0x28] sm:$0xff]
    %v499 = vld [vmem:[%s4 + $0x30] sm:$0xff]
    %v500 = vld [vmem:[%s4 + $0x38] sm:$0xff]
    %v501 = vld [vmem:[%s4 + $0x40] sm:$0xff]
    %v502 = vld [vmem:[%s4 + $0x48] sm:$0xff]
    %v503 = vld [vmem:[%s4 + $0x50] sm:$0xff]
    %v504 = vld [vmem:[%s4 + $0x58] sm:$0xff]
    %v505 = vld [vmem:[%s4 + $0x60] sm:$0xff]
    %v506 = vld [vmem:[%s4 + $0x68] sm:$0xff]
    %v507 = vld [vmem:[%s4 + $0x70] sm:$0xff]
    %v508 = vld [vmem:[%s4 + $0x78] sm:$0xff]
    %509 = vmatprep.subr.mxu0 0.0
    %510 = vmatpush1.msra.mxu0 %v493
    %511 = vmatprep.subr.mxu0 0.0
    %512 = vmatpush1.msra.mxu0 %v494
    %513 = vmatprep.subr.mxu0 0.0
    %514 = vmatpush1.msra.mxu0 %v495
    %515 = vmatprep.subr.mxu0 0.0
    %516 = vmatpush1.msra.mxu0 %v496
    %517 = vmatprep.subr.mxu0 0.0
    %518 = vmatpush1.msra.mxu0 %v497
    %519 = vmatprep.subr.mxu0 0.0
    %520 = vmatpush1.msra.mxu0 %v498
    %521 = vmatprep.subr.mxu0 0.0
    %522 = vmatpush1.msra.mxu0 %v499
    %523 = vmatprep.subr.mxu0 0.0
    %524 = vmatpush1.msra.mxu0 %v500
    %525 = vmatprep.subr.mxu0 0.0
    %526 = vmatpush1.msra.mxu0 %v501
    %527 = vmatprep.subr.mxu0 0.0
    %528 = vmatpush1.msra.mxu0 %v502
    %529 = vmatprep.subr.mxu0 0.0
    %530 = vmatpush1.msra.mxu0 %v503
    %531 = vmatprep.subr.mxu0 0.0
    %532 = vmatpush1.msra.mxu0 %v504
    %533 = vmatprep.subr.mxu0 0.0
    %534 = vmatpush1.msra.mxu0 %v505
    %535 = vmatprep.subr.mxu0 0.0
    %536 = vmatpush1.msra.mxu0 %v506
    %537 = vmatprep.subr.mxu0 0.0
    %538 = vmatpush1.msra.mxu0 %v507
    %539 = vmatprep.subr.mxu0 0.0
    %540 = vmatpush1.msra.mxu0 %v508
    %541 = vmatprep.subr.mxu0 0.0
    %542 = vmatpush1.msra.mxu0 0.0
    %543 = vmatprep.subr.mxu0 0.0
    %544 = vmatpush1.msra.mxu0 0.0
    %545 = vmatprep.subr.mxu0 0.0
    %546 = vmatpush1.msra.mxu0 0.0
    %547 = vmatprep.subr.mxu0 0.0
    %548 = vmatpush1.msra.mxu0 0.0
    %549 = vmatprep.subr.mxu0 0.0
    %550 = vmatpush1.msra.mxu0 0.0
    %551 = vmatprep.subr.mxu0 0.0
    %552 = vmatpush1.msra.mxu0 0.0
    %553 = vmatprep.subr.mxu0 0.0
    %554 = vmatpush1.msra.mxu0 0.0
    %555 = vmatprep.subr.mxu0 0.0
    %556 = vmatpush1.msra.mxu0 0.0
    %557 = vmatprep.subr.mxu0 0.0
    %558 = vmatpush1.msra.mxu0 0.0
    %559 = vmatprep.subr.mxu0 0.0
    %560 = vmatpush1.msra.mxu0 0.0
    %561 = vmatprep.subr.mxu0 0.0
    %562 = vmatpush1.msra.mxu0 0.0
    %563 = vmatprep.subr.mxu0 0.0
    %564 = vmatpush1.msra.mxu0 0.0
    %565 = vmatprep.subr.mxu0 0.0
    %566 = vmatpush1.msra.mxu0 0.0
    %567 = vmatprep.subr.mxu0 0.0
    %568 = vmatpush1.msra.mxu0 0.0
    %569 = vmatprep.subr.mxu0 0.0
    %570 = vmatpush1.msra.mxu0 0.0
    %571 = vmatprep.subr.mxu0 0.0
    %572 = vmatpush1.msra.mxu0 0.0
    %573 = vmatprep.mubr.f32.mxu0 0.0
    %574 = vmatmul.mubr.f32.gmra.mrb[0].mxu0 %v415
    %v575 = vpop.f32.mrb[0].mxu0
    %v576 = vadd.f32 0.0, %v575
    %v577 = vpop.f32.mrb[0].mxu0
    %578 = vmatprep.mubr.f32.mxu0 0.0
    %579 = vmatmul.mubr.f32.gmra.mrb[0].mxu0 %v420
    %v580 = vpop.f32.mrb[0].mxu0
    %v581 = vadd.f32 0.0, %v580
    %v582 = vpop.f32.mrb[0].mxu0
    %583 = vmatprep.mubr.f32.mxu0 0.0
    %584 = vmatmul.mubr.f32.gmra.mrb[0].mxu0 %v425
    %v585 = vpop.f32.mrb[0].mxu0
    %v586 = vadd.f32 0.0, %v585
    %v587 = vpop.f32.mrb[0].mxu0
    %588 = vmatprep.mubr.f32.mxu0 0.0
    %589 = vmatmul.mubr.f32.gmra.mrb[0].mxu0 %v430
    %v590 = vpop.f32.mrb[0].mxu0
    %v591 = vadd.f32 0.0, %v590
    %v592 = vpop.f32.mrb[0].mxu0
    %593 = vmatprep.mubr.f32.mxu0 0.0
    %594 = vmatmul.mubr.f32.gmra.mrb[0].mxu0 %v435
    %v595 = vpop.f32.mrb[0].mxu0
    %v596 = vadd.f32 0.0, %v595
    %v597 = vpop.f32.mrb[0].mxu0
    %598 = vmatprep.mubr.f32.mxu0 0.0
    %599 = vmatmul.mubr.f32.gmra.mrb[0].mxu0 %v440
    %v600 = vpop.f32.mrb[0].mxu0
    %v601 = vadd.f32 0.0, %v600
    %v602 = vpop.f32.mrb[0].mxu0
    %603 = vmatprep.mubr.f32.mxu0 0.0
    %604 = vmatmul.mubr.f32.gmra.mrb[0].mxu0 %v445
    %v605 = vpop.f32.mrb[0].mxu0
    %v606 = vadd.f32 0.0, %v605
    %v607 = vpop.f32.mrb[0].mxu0
    %608 = vmatprep.mubr.f32.mxu0 0.0
    %609 = vmatmul.mubr.f32.gmra.mrb[0].mxu0 %v450
    %v610 = vpop.f32.mrb[0].mxu0
    %v611 = vadd.f32 0.0, %v610
    %v612 = vpop.f32.mrb[0].mxu0
    %613 = vmatprep.mubr.f32.mxu0 0.0
    %614 = vmatmul.mubr.f32.gmra.mrb[0].mxu0 %v455
    %v615 = vpop.f32.mrb[0].mxu0
    %v616 = vadd.f32 0.0, %v615
    %v617 = vpop.f32.mrb[0].mxu0
    %618 = vmatprep.mubr.f32.mxu0 0.0
    %619 = vmatmul.mubr.f32.gmra.mrb[0].mxu0 %v460
    %v620 = vpop.f32.mrb[0].mxu0
    %v621 = vadd.f32 0.0, %v620
    %v622 = vpop.f32.mrb[0].mxu0
    %623 = vmatprep.mubr.f32.mxu0 0.0
    %624 = vmatmul.mubr.f32.gmra.mrb[0].mxu0 %v465
    %v625 = vpop.f32.mrb[0].mxu0
    %v626 = vadd.f32 0.0, %v625
    %v627 = vpop.f32.mrb[0].mxu0
    %628 = vmatprep.mubr.f32.mxu0 0.0
    %629 = vmatmul.mubr.f32.gmra.mrb[0].mxu0 %v470
    %v630 = vpop.f32.mrb[0].mxu0
    %v631 = vadd.f32 0.0, %v630
    %v632 = vpop.f32.mrb[0].mxu0
    %633 = vmatprep.mubr.f32.mxu0 0.0
    %634 = vmatmul.mubr.f32.gmra.mrb[0].mxu0 %v475
    %v635 = vpop.f32.mrb[0].mxu0
    %v636 = vadd.f32 0.0, %v635
    %v637 = vpop.f32.mrb[0].mxu0
    %638 = vmatprep.mubr.f32.mxu0 0.0
    %639 = vmatmul.mubr.f32.gmra.mrb[0].mxu0 %v480
    %v640 = vpop.f32.mrb[0].mxu0
    %v641 = vadd.f32 0.0, %v640
    %v642 = vpop.f32.mrb[0].mxu0
    %643 = vmatprep.mubr.f32.mxu0 0.0
    %644 = vmatmul.mubr.f32.gmra.mrb[0].mxu0 %v485
    %v645 = vpop.f32.mrb[0].mxu0
    %v646 = vadd.f32 0.0, %v645
    %v647 = vpop.f32.mrb[0].mxu0
    %648 = vmatprep.mubr.f32.mxu0 0.0
    %649 = vmatmul.mubr.f32.gmra.mrb[0].mxu0 %v490
    %v650 = vpop.f32.mrb[0].mxu0
    %v651 = vadd.f32 0.0, %v650
    %v652 = vpop.f32.mrb[0].mxu0
    %653 = vdwg.mxu0
    %654 = vst [vmem:[%s5] sm:$0xff] %v576
    %655 = vst [vmem:[%s5 + $0x8] sm:$0xff] %v581
    %656 = vst [vmem:[%s5 + $0x10] sm:$0xff] %v586
    %657 = vst [vmem:[%s5 + $0x18] sm:$0xff] %v591
    %658 = vst [vmem:[%s5 + $0x20] sm:$0xff] %v596
    %659 = vst [vmem:[%s5 + $0x28] sm:$0xff] %v601
    %660 = vst [vmem:[%s5 + $0x30] sm:$0xff] %v606
    %661 = vst [vmem:[%s5 + $0x38] sm:$0xff] %v611
    %662 = vst [vmem:[%s5 + $0x40] sm:$0xff] %v616
    %663 = vst [vmem:[%s5 + $0x48] sm:$0xff] %v621
    %664 = vst [vmem:[%s5 + $0x50] sm:$0xff] %v626
    %665 = vst [vmem:[%s5 + $0x58] sm:$0xff] %v631
    %666 = vst [vmem:[%s5 + $0x60] sm:$0xff] %v636
    %667 = vst [vmem:[%s5 + $0x68] sm:$0xff] %v641
    %668 = vst [vmem:[%s5 + $0x70] sm:$0xff] %v646
    %669 = vst [vmem:[%s5 + $0x78] sm:$0xff] %v651
  $region29: #{trend_block_forward.3} parent=0 // pred_fallthru
    _
  // Predicated region
  $region30: #{trend_block_forward.3} parent=0 // pred_check
    _
  $region31: #{trend_block_forward.3} parent=0 // pred_check_branch
    %671 = sbr.rel (0) target = $region33
  $region32: #{trend_block_forward.3} parent=0 // pred_region
    _
  $region33: #{trend_block_forward.3} parent=0 // pred_fallthru
    _
  // Predicated region
  $region34: #{trend_block_forward.3} parent=0 // pred_check
    _
  $region35: #{trend_block_forward.3} parent=0 // pred_check_branch
    %673 = sbr.rel (0) target = $region37
  $region36: #{trend_block_forward.3} parent=0 // pred_region
    _
  $region37: #{trend_block_forward.3} parent=0 // pred_fallthru
    _

</llo_original>
